<compile_context>
chip_gen: v7x
topology: tpu7x:2x2x1
jax: 0.10.0
libtpu: 0.0.40
codegen_flags: <defaults>
</compile_context>

<pallas_src>
import jax
import jax.numpy as jnp
from jax import lax
from jax.experimental import pallas as pl
from jax.experimental.pallas import tpu as pltpu


def rcnn_text_kernel(x_ref, h0_ref,
                     wih_ref, whh_ref, w1h_ref, w1x_ref, b1_ref,
                     w2_ref, b2_ref,
                     out_ref,
                     xp_scr, hid_scr, pre_scr):
    # x_ref  : (T*Bt, 2D)  rows time-major within the batch tile (row = t*Bt + b),
    #                      columns = [x(t) | x(T-1-t)]  (bwd input pre-reversed).
    # h0_ref : (Bt, 2H)    fused [h0_fwd | h0_bwd] initial hidden state.
    # out_ref: (Bt, C)
    # xp_scr : (T*Bt, 2H)  hoisted fused input projections.
    # hid_scr: (T*Bt, 2H)  hidden states, time-aligned: row t = [h_f(t) | h_b(t)].
    # pre_scr: (T*Bt, L2)  linear1 output (pre-pool).
    Bt = h0_ref.shape[0]
    H2 = h0_ref.shape[1]
    H = H2 // 2
    T = xp_scr.shape[0] // Bt

    x_all = x_ref[...]                                     # (T*Bt, 2D)

    # ---- hoisted fused input projection: one large MXU matmul for both dirs ----
    xp_scr[...] = jnp.dot(x_all, wih_ref[...], preferred_element_type=jnp.float32)

    whh_bd = whh_ref[...]                                  # (2H, 2H) block-diagonal

    # ---- serial bidirectional recurrence on a fused (Bt, 2H) state ----
    def step(t, h):
        rf = pl.multiple_of(t * Bt, Bt)                    # natural time t
        rb = pl.multiple_of((T - 1 - t) * Bt, Bt)          # bwd processes time T-1-t
        h = jnp.tanh(xp_scr[pl.ds(rf, Bt), :] +
                     jnp.dot(h, whh_bd, preferred_element_type=jnp.float32))
        hid_scr[pl.ds(rf, Bt), pl.ds(0, H)] = h[:, :H]     # fwd hidden at time t
        hid_scr[pl.ds(rb, Bt), pl.ds(H, H)] = h[:, H:]     # bwd hidden at time T-1-t
        return h

    lax.fori_loop(0, T, step, h0_ref[...],
                  unroll=(True if T <= 16 else 8))

    # ---- linear1 on concat([h_f, h_b, x]) as two fused matmuls (dropout = id) ----
    # b1 is added after the pool (max(x + b) == max(x) + b).
    pre_scr[...] = (
        jnp.dot(hid_scr[...], w1h_ref[...], preferred_element_type=jnp.float32)
        + jnp.dot(x_all, w1x_ref[...], preferred_element_type=jnp.float32))

    # ---- max_pool1d over the full sequence: running max over row blocks ----
    def pool_step(t, acc):
        r = pl.multiple_of(t * Bt, Bt)
        return jnp.maximum(acc, pre_scr[pl.ds(r, Bt), :])

    pooled = lax.fori_loop(1, T, pool_step, pre_scr[pl.ds(0, Bt), :],
                           unroll=(True if T <= 16 else 8))
    pooled = pooled + b1_ref[...]                          # (Bt, L2)

    # ---- linear2 ----
    out_ref[...] = (jnp.dot(pooled, w2_ref[...], preferred_element_type=jnp.float32)
                    + b2_ref[...]).astype(out_ref.dtype)


def rcnn_text_forward(x, h0, params, *, batch_tile=None, vmem_budget_bytes=24 << 20):
    """x: (B, T, D) batch-first (PyTorch convention); h0: (2, B, H)."""
    B, T, D = x.shape
    H = params['wih_f'].shape[0]
    L2, F1 = params['w1'].shape
    C = params['w2'].shape[0]
    assert F1 == D + 2 * H
    H2 = 2 * H

    # ---- pad batch up to a multiple of 8 sublanes (padded rows sliced off) ----
    B_pad = ((B + 7) // 8) * 8
    if B_pad != B:
        x = jnp.concatenate([x, jnp.zeros((B_pad - B, T, D), x.dtype)], axis=0)
        h0 = jnp.concatenate([h0, jnp.zeros((2, B_pad - B, H), h0.dtype)], axis=1)

    # ---- batch tile / grid selection ----
    # Per-program VMEM estimate (last dims pad to 128 lanes, f32).
    def bytes_per_program(bt):
        row = 4 * 128
        return (2 * T * bt * row          # x block (double-buffered)
                + 3 * T * bt * row        # xp / hid / pre scratches
                + 2 * bt * row            # out block
                + (64 << 10))             # weights & slack

    n_cores = 1
    try:
        kind = jax.devices()[0].device_kind.lower()
        if ('v7' in kind) or ('tpu7' in kind):
            n_cores = 2                   # v7x: 2 TensorCores per chip
    except Exception:
        pass

    if batch_tile is not None:
        Bt = batch_tile
        assert B_pad % Bt == 0 and (Bt % 8 == 0 or Bt == B_pad)
    else:
        nbt = n_cores if (B_pad % (8 * n_cores) == 0) else 1
        Bt = B_pad // nbt
        # Split further only if VMEM footprint would blow the budget.
        while Bt % 16 == 0 and bytes_per_program(Bt) > vmem_budget_bytes:
            Bt //= 2
    nbt = B_pad // Bt

    # ---- pre-tile x: rows time-major within tile, columns [x(t) | x(T-1-t)] ----
    x_fused = jnp.concatenate([x, jnp.flip(x, axis=1)], axis=-1)     # (B_pad, T, 2D)
    x_tiled = jnp.reshape(
        jnp.transpose(jnp.reshape(x_fused, (nbt, Bt, T, 2 * D)), (0, 2, 1, 3)),
        (nbt, T * Bt, 2 * D))

    h0_fused = jnp.concatenate([h0[0], h0[1]], axis=-1)              # (B_pad, 2H)

    # ---- fused / pre-transposed weights (K, N layout everywhere) ----
    wih_bd = jnp.zeros((2 * D, H2), jnp.float32)
    wih_bd = wih_bd.at[:D, :H].set(params['wih_f'].T)
    wih_bd = wih_bd.at[D:, H:].set(params['wih_b'].T)                # (2D, 2H)
    whh_bd = jnp.zeros((H2, H2), jnp.float32)
    whh_bd = whh_bd.at[:H, :H].set(params['whh_f'].T)
    whh_bd = whh_bd.at[H:, H:].set(params['whh_b'].T)                # (2H, 2H)
    w1 = params['w1']                                                # (L2, 2H + D)
    w1h = w1[:, :H2].T                                               # (2H, L2)
    w1x = jnp.concatenate([w1[:, H2:].T,
                           jnp.zeros((D, L2), jnp.float32)], axis=0) # (2D, L2)
    b1 = params['b1'].reshape(1, L2)
    w2t = params['w2'].T                                             # (L2, C)
    b2 = params['b2'].reshape(1, C)

    def full_spec(a):
        nd = a.ndim
        return pl.BlockSpec(a.shape, lambda b, _nd=nd: (0,) * _nd)

    flops = (2 * T * B_pad * (2 * D) * H2        # fused input projection
             + 2 * T * B_pad * H2 * H2           # recurrence matmuls
             + 2 * T * B_pad * (H2 + 2 * D) * L2 # linear1
             + 2 * B_pad * L2 * C)               # linear2
    bytes_accessed = 4 * (x_tiled.size + h0_fused.size + B_pad * C
                          + wih_bd.size + whh_bd.size + w1h.size + w1x.size
                          + L2 + L2 * C + C)
    cost = pl.CostEstimate(flops=flops,
                           transcendentals=T * B_pad * H2,
                           bytes_accessed=bytes_accessed)

    vmem_limit = int(min(max(2 * bytes_per_program(Bt), 16 << 20), 48 << 20))

    out = pl.pallas_call(
        rcnn_text_kernel,
        out_shape=jax.ShapeDtypeStruct((B_pad, C), jnp.float32),
        grid=(nbt,),
        in_specs=[
            pl.BlockSpec((None, T * Bt, 2 * D), lambda b: (b, 0, 0)),   # x batch tile
            pl.BlockSpec((Bt, H2), lambda b: (b, 0)),                   # h0 batch tile
            full_spec(wih_bd), full_spec(whh_bd),
            full_spec(w1h), full_spec(w1x), full_spec(b1),
            full_spec(w2t), full_spec(b2),
        ],
        out_specs=pl.BlockSpec((Bt, C), lambda b: (b, 0)),
        scratch_shapes=[pltpu.VMEM((T * Bt, H2), jnp.float32),   # input projections
                        pltpu.VMEM((T * Bt, H2), jnp.float32),   # hidden states
                        pltpu.VMEM((T * Bt, L2), jnp.float32)],  # linear1 pre-pool
        compiler_params=pltpu.CompilerParams(
            dimension_semantics=("parallel",),
            vmem_limit_bytes=vmem_limit),
        cost_estimate=cost,
    )(x_tiled, h0_fused, wih_bd, whh_bd, w1h, w1x, b1, w2t, b2)

    return out[:B]


def rcnn_text_reference(x, h0, params):
    """Pure-JAX reference mirroring the PyTorch forward (eval mode)."""
    B, T, D = x.shape
    H = params['wih_f'].shape[0]

    def run_dir(wih, whh, h_init, seq):
        def step(h, xt):
            h = jnp.tanh(xt @ wih.T + h @ whh.T)
            return h, h
        _, hs = lax.scan(step, h_init, seq)     # (T, B, H)
        return hs

    x_tm = jnp.transpose(x, (1, 0, 2))
    hf = run_dir(params['wih_f'], params['whh_f'], h0[0], x_tm)
    hb = run_dir(params['wih_b'], params['whh_b'], h0[1], x_tm[::-1])[::-1]
    out = jnp.concatenate([hf, hb, x_tm], axis=-1)           # (T, B, F1)
    out = jnp.transpose(out, (1, 0, 2)).reshape(B * T, -1)   # view(-1, F1)
    out = out @ params['w1'].T + params['b1']
    out = out.reshape(B, T, -1)
    out = jnp.max(out, axis=1)                               # max_pool1d over T
    return out @ params['w2'].T + params['b2']


if __name__ == "__main__":
    # Small shapes consistent with the module.
    B, T, D, H = 16, 8, 16, 32
    L1 = D + 2 * H        # linear_size1 must equal input_size + 2*hidden_size
    L2 = 32               # linear_size2
    C = 4                 # num_classes

    key = jax.random.PRNGKey(0)
    ks = jax.random.split(key, 10)
    init = lambda k, shp, s=0.1: jax.random.uniform(k, shp, jnp.float32, -s, s)

    params = {
        'wih_f': init(ks[0], (H, D)),
        'whh_f': init(ks[1], (H, H)),
        'wih_b': init(ks[2], (H, D)),
        'whh_b': init(ks[3], (H, H)),
        'w1':    init(ks[4], (L2, L1)),
        'b1':    init(ks[5], (L2,)),
        'w2':    init(ks[6], (C, L2)),
        'b2':    init(ks[7], (C,)),
    }
    x = jax.random.normal(ks[8], (B, T, D), jnp.float32)
    h0 = init(ks[9], (2, B, H), 0.05)         # (num_directions, B, H)

    logits = jax.block_until_ready(rcnn_text_forward(x, h0, params))
    ref = jax.block_until_ready(rcnn_text_reference(x, h0, params))

    assert logits.shape == (B, C)
    assert jnp.allclose(logits, ref, rtol=1e-4, atol=1e-4), (
        float(jnp.max(jnp.abs(logits - ref))))
    print("KERNEL_OK")
</pallas_src>

<mosaic_0001>
module attributes {stable_mosaic.version = 11 : i64} {
  func.func @rcnn_text_kernel(%arg0: i32, %arg1: memref<1x128x32xf32, #tpu.memory_space<vmem>>, %arg2: memref<16x64xf32, #tpu.memory_space<vmem>>, %arg3: memref<32x64xf32, #tpu.memory_space<vmem>>, %arg4: memref<64x64xf32, #tpu.memory_space<vmem>>, %arg5: memref<64x32xf32, #tpu.memory_space<vmem>>, %arg6: memref<32x32xf32, #tpu.memory_space<vmem>>, %arg7: memref<1x32xf32, #tpu.memory_space<vmem>>, %arg8: memref<32x4xf32, #tpu.memory_space<vmem>>, %arg9: memref<1x4xf32, #tpu.memory_space<vmem>>, %arg10: memref<16x4xf32, #tpu.memory_space<vmem>>, %arg11: memref<128x64xf32, #tpu.memory_space<vmem>>, %arg12: memref<128x64xf32, #tpu.memory_space<vmem>>, %arg13: memref<128x32xf32, #tpu.memory_space<vmem>>) attributes {dimension_semantics = [#tpu.dimension_semantics<parallel>], iteration_bounds = array<i64: 1>, scalar_prefetch = 0 : i64, scratch_operands = 3 : i64, tpu.core_type = #tpu.core_type<tc>, window_params = [{transform_indices = @transform_0, window_bounds = array<i64: 1, 128, 32>}, {transform_indices = @transform_1, window_bounds = array<i64: 16, 64>}, {pipeline_mode = #tpu.pipeline_mode<synchronous>, transform_indices = @transform_2, window_bounds = array<i64: 32, 64>}, {pipeline_mode = #tpu.pipeline_mode<synchronous>, transform_indices = @transform_3, window_bounds = array<i64: 64, 64>}, {pipeline_mode = #tpu.pipeline_mode<synchronous>, transform_indices = @transform_4, window_bounds = array<i64: 64, 32>}, {pipeline_mode = #tpu.pipeline_mode<synchronous>, transform_indices = @transform_5, window_bounds = array<i64: 32, 32>}, {pipeline_mode = #tpu.pipeline_mode<synchronous>, transform_indices = @transform_6, window_bounds = array<i64: 1, 32>}, {pipeline_mode = #tpu.pipeline_mode<synchronous>, transform_indices = @transform_7, window_bounds = array<i64: 32, 4>}, {pipeline_mode = #tpu.pipeline_mode<synchronous>, transform_indices = @transform_8, window_bounds = array<i64: 1, 4>}, {transform_indices = @transform_9, window_bounds = array<i64: 16, 4>}]} {
    %c0 = arith.constant 0 : index
    %c0_0 = arith.constant 0 : index
    %c0_1 = arith.constant 0 : index
    %0 = vector.load %arg1[%c0, %c0_0, %c0_1] : memref<1x128x32xf32, #tpu.memory_space<vmem>>, vector<1x128x32xf32>
    %1 = vector.shape_cast %0 : vector<1x128x32xf32> to vector<128x32xf32>
    %c0_2 = arith.constant 0 : index
    %c0_3 = arith.constant 0 : index
    %2 = vector.load %arg3[%c0_2, %c0_3] : memref<32x64xf32, #tpu.memory_space<vmem>>, vector<32x64xf32>
    %cst = arith.constant dense<0.000000e+00> : vector<128x64xf32>
    %3 = tpu.matmul %1, %2, %cst {dimension_numbers = #tpu.dot_dimension_numbers<[1], [0], [0], [1], [0, 0, 1, 1], [], []>} : vector<128x32xf32>, vector<32x64xf32>, vector<128x64xf32> -> vector<128x64xf32>
    %c0_4 = arith.constant 0 : index
    %c0_5 = arith.constant 0 : index
    %4 = vector.load %arg11[%c0_4, %c0_5] : memref<128x64xf32, #tpu.memory_space<vmem>>, vector<128x64xf32>
    tpu.vector_store %arg11[%c0_4, %c0_5], %3 {strides = array<i32>} : memref<128x64xf32, #tpu.memory_space<vmem>>, vector<128x64xf32>,
    %c0_6 = arith.constant 0 : index
    %c0_7 = arith.constant 0 : index
    %5 = vector.load %arg4[%c0_6, %c0_7] : memref<64x64xf32, #tpu.memory_space<vmem>>, vector<64x64xf32>
    %c0_8 = arith.constant 0 : index
    %c0_9 = arith.constant 0 : index
    %6 = vector.load %arg2[%c0_8, %c0_9] : memref<16x64xf32, #tpu.memory_space<vmem>>, vector<16x64xf32>
    %c0_i32 = arith.constant 0 : i32
    %c16_i32 = arith.constant 16 : i32
    %7 = arith.muli %c0_i32, %c16_i32 : i32
    %8 = tpu.assume_multiple %7, 16 : i32
    %c7_i32 = arith.constant 7 : i32
    %9 = arith.subi %c7_i32, %c0_i32 : i32
    %c16_i32_10 = arith.constant 16 : i32
    %10 = arith.muli %9, %c16_i32_10 : i32
    %11 = tpu.assume_multiple %10, 16 : i32
    %12 = arith.index_cast %8 : i32 to index
    %c0_11 = arith.constant 0 : index
    %13 = vector.load %arg11[%12, %c0_11] : memref<128x64xf32, #tpu.memory_space<vmem>>, vector<16x64xf32>
    %cst_12 = arith.constant dense<0.000000e+00> : vector<16x64xf32>
    %14 = tpu.matmul %6, %5, %cst_12 {dimension_numbers = #tpu.dot_dimension_numbers<[1], [0], [0], [1], [0, 0, 1, 1], [], []>} : vector<16x64xf32>, vector<64x64xf32>, vector<16x64xf32> -> vector<16x64xf32>
    %15 = arith.addf %13, %14 : vector<16x64xf32>
    %16 = math.tanh %15 : vector<16x64xf32>
    %17 = vector.extract_strided_slice %16 {offsets = [0, 0], sizes = [16, 32], strides = [1, 1]} : vector<16x64xf32> to vector<16x32xf32>
    %18 = arith.index_cast %8 : i32 to index
    %c0_13 = arith.constant 0 : index
    %19 = vector.load %arg12[%18, %c0_13] : memref<128x64xf32, #tpu.memory_space<vmem>>, vector<16x32xf32>
    tpu.vector_store %arg12[%18, %c0_13], %17 {strides = array<i32>} : memref<128x64xf32, #tpu.memory_space<vmem>>, vector<16x32xf32>,
    %20 = vector.extract_strided_slice %16 {offsets = [0, 32], sizes = [16, 32], strides = [1, 1]} : vector<16x64xf32> to vector<16x32xf32>
    %21 = arith.index_cast %11 : i32 to index
    %c32 = arith.constant 32 : index
    %22 = vector.load %arg12[%21, %c32] : memref<128x64xf32, #tpu.memory_space<vmem>>, vector<16x32xf32>
    tpu.vector_store %arg12[%21, %c32], %20 {strides = array<i32>} : memref<128x64xf32, #tpu.memory_space<vmem>>, vector<16x32xf32>,
    %c1_i32 = arith.constant 1 : i32
    %c16_i32_14 = arith.constant 16 : i32
    %23 = arith.muli %c1_i32, %c16_i32_14 : i32
    %24 = tpu.assume_multiple %23, 16 : i32
    %c7_i32_15 = arith.constant 7 : i32
    %25 = arith.subi %c7_i32_15, %c1_i32 : i32
    %c16_i32_16 = arith.constant 16 : i32
    %26 = arith.muli %25, %c16_i32_16 : i32
    %27 = tpu.assume_multiple %26, 16 : i32
    %28 = arith.index_cast %24 : i32 to index
    %c0_17 = arith.constant 0 : index
    %29 = vector.load %arg11[%28, %c0_17] : memref<128x64xf32, #tpu.memory_space<vmem>>, vector<16x64xf32>
    %cst_18 = arith.constant dense<0.000000e+00> : vector<16x64xf32>
    %30 = tpu.matmul %16, %5, %cst_18 {dimension_numbers = #tpu.dot_dimension_numbers<[1], [0], [0], [1], [0, 0, 1, 1], [], []>} : vector<16x64xf32>, vector<64x64xf32>, vector<16x64xf32> -> vector<16x64xf32>
    %31 = arith.addf %29, %30 : vector<16x64xf32>
    %32 = math.tanh %31 : vector<16x64xf32>
    %33 = vector.extract_strided_slice %32 {offsets = [0, 0], sizes = [16, 32], strides = [1, 1]} : vector<16x64xf32> to vector<16x32xf32>
    %34 = arith.index_cast %24 : i32 to index
    %c0_19 = arith.constant 0 : index
    %35 = vector.load %arg12[%34, %c0_19] : memref<128x64xf32, #tpu.memory_space<vmem>>, vector<16x32xf32>
    tpu.vector_store %arg12[%34, %c0_19], %33 {strides = array<i32>} : memref<128x64xf32, #tpu.memory_space<vmem>>, vector<16x32xf32>,
    %36 = vector.extract_strided_slice %32 {offsets = [0, 32], sizes = [16, 32], strides = [1, 1]} : vector<16x64xf32> to vector<16x32xf32>
    %37 = arith.index_cast %27 : i32 to index
    %c32_20 = arith.constant 32 : index
    %38 = vector.load %arg12[%37, %c32_20] : memref<128x64xf32, #tpu.memory_space<vmem>>, vector<16x32xf32>
    tpu.vector_store %arg12[%37, %c32_20], %36 {strides = array<i32>} : memref<128x64xf32, #tpu.memory_space<vmem>>, vector<16x32xf32>,
    %c2_i32 = arith.constant 2 : i32
    %c16_i32_21 = arith.constant 16 : i32
    %39 = arith.muli %c2_i32, %c16_i32_21 : i32
    %40 = tpu.assume_multiple %39, 16 : i32
    %c7_i32_22 = arith.constant 7 : i32
    %41 = arith.subi %c7_i32_22, %c2_i32 : i32
    %c16_i32_23 = arith.constant 16 : i32
    %42 = arith.muli %41, %c16_i32_23 : i32
    %43 = tpu.assume_multiple %42, 16 : i32
    %44 = arith.index_cast %40 : i32 to index
    %c0_24 = arith.constant 0 : index
    %45 = vector.load %arg11[%44, %c0_24] : memref<128x64xf32, #tpu.memory_space<vmem>>, vector<16x64xf32>
    %cst_25 = arith.constant dense<0.000000e+00> : vector<16x64xf32>
    %46 = tpu.matmul %32, %5, %cst_25 {dimension_numbers = #tpu.dot_dimension_numbers<[1], [0], [0], [1], [0, 0, 1, 1], [], []>} : vector<16x64xf32>, vector<64x64xf32>, vector<16x64xf32> -> vector<16x64xf32>
    %47 = arith.addf %45, %46 : vector<16x64xf32>
    %48 = math.tanh %47 : vector<16x64xf32>
    %49 = vector.extract_strided_slice %48 {offsets = [0, 0], sizes = [16, 32], strides = [1, 1]} : vector<16x64xf32> to vector<16x32xf32>
    %50 = arith.index_cast %40 : i32 to index
    %c0_26 = arith.constant 0 : index
    %51 = vector.load %arg12[%50, %c0_26] : memref<128x64xf32, #tpu.memory_space<vmem>>, vector<16x32xf32>
    tpu.vector_store %arg12[%50, %c0_26], %49 {strides = array<i32>} : memref<128x64xf32, #tpu.memory_space<vmem>>, vector<16x32xf32>,
    %52 = vector.extract_strided_slice %48 {offsets = [0, 32], sizes = [16, 32], strides = [1, 1]} : vector<16x64xf32> to vector<16x32xf32>
    %53 = arith.index_cast %43 : i32 to index
    %c32_27 = arith.constant 32 : index
    %54 = vector.load %arg12[%53, %c32_27] : memref<128x64xf32, #tpu.memory_space<vmem>>, vector<16x32xf32>
    tpu.vector_store %arg12[%53, %c32_27], %52 {strides = array<i32>} : memref<128x64xf32, #tpu.memory_space<vmem>>, vector<16x32xf32>,
    %c3_i32 = arith.constant 3 : i32
    %c16_i32_28 = arith.constant 16 : i32
    %55 = arith.muli %c3_i32, %c16_i32_28 : i32
    %56 = tpu.assume_multiple %55, 16 : i32
    %c7_i32_29 = arith.constant 7 : i32
    %57 = arith.subi %c7_i32_29, %c3_i32 : i32
    %c16_i32_30 = arith.constant 16 : i32
    %58 = arith.muli %57, %c16_i32_30 : i32
    %59 = tpu.assume_multiple %58, 16 : i32
    %60 = arith.index_cast %56 : i32 to index
    %c0_31 = arith.constant 0 : index
    %61 = vector.load %arg11[%60, %c0_31] : memref<128x64xf32, #tpu.memory_space<vmem>>, vector<16x64xf32>
    %cst_32 = arith.constant dense<0.000000e+00> : vector<16x64xf32>
    %62 = tpu.matmul %48, %5, %cst_32 {dimension_numbers = #tpu.dot_dimension_numbers<[1], [0], [0], [1], [0, 0, 1, 1], [], []>} : vector<16x64xf32>, vector<64x64xf32>, vector<16x64xf32> -> vector<16x64xf32>
    %63 = arith.addf %61, %62 : vector<16x64xf32>
    %64 = math.tanh %63 : vector<16x64xf32>
    %65 = vector.extract_strided_slice %64 {offsets = [0, 0], sizes = [16, 32], strides = [1, 1]} : vector<16x64xf32> to vector<16x32xf32>
    %66 = arith.index_cast %56 : i32 to index
    %c0_33 = arith.constant 0 : index
    %67 = vector.load %arg12[%66, %c0_33] : memref<128x64xf32, #tpu.memory_space<vmem>>, vector<16x32xf32>
    tpu.vector_store %arg12[%66, %c0_33], %65 {strides = array<i32>} : memref<128x64xf32, #tpu.memory_space<vmem>>, vector<16x32xf32>,
    %68 = vector.extract_strided_slice %64 {offsets = [0, 32], sizes = [16, 32], strides = [1, 1]} : vector<16x64xf32> to vector<16x32xf32>
    %69 = arith.index_cast %59 : i32 to index
    %c32_34 = arith.constant 32 : index
    %70 = vector.load %arg12[%69, %c32_34] : memref<128x64xf32, #tpu.memory_space<vmem>>, vector<16x32xf32>
    tpu.vector_store %arg12[%69, %c32_34], %68 {strides = array<i32>} : memref<128x64xf32, #tpu.memory_space<vmem>>, vector<16x32xf32>,
    %c4_i32 = arith.constant 4 : i32
    %c16_i32_35 = arith.constant 16 : i32
    %71 = arith.muli %c4_i32, %c16_i32_35 : i32
    %72 = tpu.assume_multiple %71, 16 : i32
    %c7_i32_36 = arith.constant 7 : i32
    %73 = arith.subi %c7_i32_36, %c4_i32 : i32
    %c16_i32_37 = arith.constant 16 : i32
    %74 = arith.muli %73, %c16_i32_37 : i32
    %75 = tpu.assume_multiple %74, 16 : i32
    %76 = arith.index_cast %72 : i32 to index
    %c0_38 = arith.constant 0 : index
    %77 = vector.load %arg11[%76, %c0_38] : memref<128x64xf32, #tpu.memory_space<vmem>>, vector<16x64xf32>
    %cst_39 = arith.constant dense<0.000000e+00> : vector<16x64xf32>
    %78 = tpu.matmul %64, %5, %cst_39 {dimension_numbers = #tpu.dot_dimension_numbers<[1], [0], [0], [1], [0, 0, 1, 1], [], []>} : vector<16x64xf32>, vector<64x64xf32>, vector<16x64xf32> -> vector<16x64xf32>
    %79 = arith.addf %77, %78 : vector<16x64xf32>
    %80 = math.tanh %79 : vector<16x64xf32>
    %81 = vector.extract_strided_slice %80 {offsets = [0, 0], sizes = [16, 32], strides = [1, 1]} : vector<16x64xf32> to vector<16x32xf32>
    %82 = arith.index_cast %72 : i32 to index
    %c0_40 = arith.constant 0 : index
    %83 = vector.load %arg12[%82, %c0_40] : memref<128x64xf32, #tpu.memory_space<vmem>>, vector<16x32xf32>
    tpu.vector_store %arg12[%82, %c0_40], %81 {strides = array<i32>} : memref<128x64xf32, #tpu.memory_space<vmem>>, vector<16x32xf32>,
    %84 = vector.extract_strided_slice %80 {offsets = [0, 32], sizes = [16, 32], strides = [1, 1]} : vector<16x64xf32> to vector<16x32xf32>
    %85 = arith.index_cast %75 : i32 to index
    %c32_41 = arith.constant 32 : index
    %86 = vector.load %arg12[%85, %c32_41] : memref<128x64xf32, #tpu.memory_space<vmem>>, vector<16x32xf32>
    tpu.vector_store %arg12[%85, %c32_41], %84 {strides = array<i32>} : memref<128x64xf32, #tpu.memory_space<vmem>>, vector<16x32xf32>,
    %c5_i32 = arith.constant 5 : i32
    %c16_i32_42 = arith.constant 16 : i32
    %87 = arith.muli %c5_i32, %c16_i32_42 : i32
    %88 = tpu.assume_multiple %87, 16 : i32
    %c7_i32_43 = arith.constant 7 : i32
    %89 = arith.subi %c7_i32_43, %c5_i32 : i32
    %c16_i32_44 = arith.constant 16 : i32
    %90 = arith.muli %89, %c16_i32_44 : i32
    %91 = tpu.assume_multiple %90, 16 : i32
    %92 = arith.index_cast %88 : i32 to index
    %c0_45 = arith.constant 0 : index
    %93 = vector.load %arg11[%92, %c0_45] : memref<128x64xf32, #tpu.memory_space<vmem>>, vector<16x64xf32>
    %cst_46 = arith.constant dense<0.000000e+00> : vector<16x64xf32>
    %94 = tpu.matmul %80, %5, %cst_46 {dimension_numbers = #tpu.dot_dimension_numbers<[1], [0], [0], [1], [0, 0, 1, 1], [], []>} : vector<16x64xf32>, vector<64x64xf32>, vector<16x64xf32> -> vector<16x64xf32>
    %95 = arith.addf %93, %94 : vector<16x64xf32>
    %96 = math.tanh %95 : vector<16x64xf32>
    %97 = vector.extract_strided_slice %96 {offsets = [0, 0], sizes = [16, 32], strides = [1, 1]} : vector<16x64xf32> to vector<16x32xf32>
    %98 = arith.index_cast %88 : i32 to index
    %c0_47 = arith.constant 0 : index
    %99 = vector.load %arg12[%98, %c0_47] : memref<128x64xf32, #tpu.memory_space<vmem>>, vector<16x32xf32>
    tpu.vector_store %arg12[%98, %c0_47], %97 {strides = array<i32>} : memref<128x64xf32, #tpu.memory_space<vmem>>, vector<16x32xf32>,
    %100 = vector.extract_strided_slice %96 {offsets = [0, 32], sizes = [16, 32], strides = [1, 1]} : vector<16x64xf32> to vector<16x32xf32>
    %101 = arith.index_cast %91 : i32 to index
    %c32_48 = arith.constant 32 : index
    %102 = vector.load %arg12[%101, %c32_48] : memref<128x64xf32, #tpu.memory_space<vmem>>, vector<16x32xf32>
    tpu.vector_store %arg12[%101, %c32_48], %100 {strides = array<i32>} : memref<128x64xf32, #tpu.memory_space<vmem>>, vector<16x32xf32>,
    %c6_i32 = arith.constant 6 : i32
    %c16_i32_49 = arith.constant 16 : i32
    %103 = arith.muli %c6_i32, %c16_i32_49 : i32
    %104 = tpu.assume_multiple %103, 16 : i32
    %c7_i32_50 = arith.constant 7 : i32
    %105 = arith.subi %c7_i32_50, %c6_i32 : i32
    %c16_i32_51 = arith.constant 16 : i32
    %106 = arith.muli %105, %c16_i32_51 : i32
    %107 = tpu.assume_multiple %106, 16 : i32
    %108 = arith.index_cast %104 : i32 to index
    %c0_52 = arith.constant 0 : index
    %109 = vector.load %arg11[%108, %c0_52] : memref<128x64xf32, #tpu.memory_space<vmem>>, vector<16x64xf32>
    %cst_53 = arith.constant dense<0.000000e+00> : vector<16x64xf32>
    %110 = tpu.matmul %96, %5, %cst_53 {dimension_numbers = #tpu.dot_dimension_numbers<[1], [0], [0], [1], [0, 0, 1, 1], [], []>} : vector<16x64xf32>, vector<64x64xf32>, vector<16x64xf32> -> vector<16x64xf32>
    %111 = arith.addf %109, %110 : vector<16x64xf32>
    %112 = math.tanh %111 : vector<16x64xf32>
    %113 = vector.extract_strided_slice %112 {offsets = [0, 0], sizes = [16, 32], strides = [1, 1]} : vector<16x64xf32> to vector<16x32xf32>
    %114 = arith.index_cast %104 : i32 to index
    %c0_54 = arith.constant 0 : index
    %115 = vector.load %arg12[%114, %c0_54] : memref<128x64xf32, #tpu.memory_space<vmem>>, vector<16x32xf32>
    tpu.vector_store %arg12[%114, %c0_54], %113 {strides = array<i32>} : memref<128x64xf32, #tpu.memory_space<vmem>>, vector<16x32xf32>,
    %116 = vector.extract_strided_slice %112 {offsets = [0, 32], sizes = [16, 32], strides = [1, 1]} : vector<16x64xf32> to vector<16x32xf32>
    %117 = arith.index_cast %107 : i32 to index
    %c32_55 = arith.constant 32 : index
    %118 = vector.load %arg12[%117, %c32_55] : memref<128x64xf32, #tpu.memory_space<vmem>>, vector<16x32xf32>
    tpu.vector_store %arg12[%117, %c32_55], %116 {strides = array<i32>} : memref<128x64xf32, #tpu.memory_space<vmem>>, vector<16x32xf32>,
    %c7_i32_56 = arith.constant 7 : i32
    %c16_i32_57 = arith.constant 16 : i32
    %119 = arith.muli %c7_i32_56, %c16_i32_57 : i32
    %120 = tpu.assume_multiple %119, 16 : i32
    %c7_i32_58 = arith.constant 7 : i32
    %121 = arith.subi %c7_i32_58, %c7_i32_56 : i32
    %c16_i32_59 = arith.constant 16 : i32
    %122 = arith.muli %121, %c16_i32_59 : i32
    %123 = tpu.assume_multiple %122, 16 : i32
    %124 = arith.index_cast %120 : i32 to index
    %c0_60 = arith.constant 0 : index
    %125 = vector.load %arg11[%124, %c0_60] : memref<128x64xf32, #tpu.memory_space<vmem>>, vector<16x64xf32>
    %cst_61 = arith.constant dense<0.000000e+00> : vector<16x64xf32>
    %126 = tpu.matmul %112, %5, %cst_61 {dimension_numbers = #tpu.dot_dimension_numbers<[1], [0], [0], [1], [0, 0, 1, 1], [], []>} : vector<16x64xf32>, vector<64x64xf32>, vector<16x64xf32> -> vector<16x64xf32>
    %127 = arith.addf %125, %126 : vector<16x64xf32>
    %128 = math.tanh %127 : vector<16x64xf32>
    %129 = vector.extract_strided_slice %128 {offsets = [0, 0], sizes = [16, 32], strides = [1, 1]} : vector<16x64xf32> to vector<16x32xf32>
    %130 = arith.index_cast %120 : i32 to index
    %c0_62 = arith.constant 0 : index
    %131 = vector.load %arg12[%130, %c0_62] : memref<128x64xf32, #tpu.memory_space<vmem>>, vector<16x32xf32>
    tpu.vector_store %arg12[%130, %c0_62], %129 {strides = array<i32>} : memref<128x64xf32, #tpu.memory_space<vmem>>, vector<16x32xf32>,
    %132 = vector.extract_strided_slice %128 {offsets = [0, 32], sizes = [16, 32], strides = [1, 1]} : vector<16x64xf32> to vector<16x32xf32>
    %133 = arith.index_cast %123 : i32 to index
    %c32_63 = arith.constant 32 : index
    %134 = vector.load %arg12[%133, %c32_63] : memref<128x64xf32, #tpu.memory_space<vmem>>, vector<16x32xf32>
    tpu.vector_store %arg12[%133, %c32_63], %132 {strides = array<i32>} : memref<128x64xf32, #tpu.memory_space<vmem>>, vector<16x32xf32>,
    %c8_i32 = arith.constant 8 : i32
    %c0_64 = arith.constant 0 : index
    %c0_65 = arith.constant 0 : index
    %135 = vector.load %arg12[%c0_64, %c0_65] : memref<128x64xf32, #tpu.memory_space<vmem>>, vector<128x64xf32>
    %c0_66 = arith.constant 0 : index
    %c0_67 = arith.constant 0 : index
    %136 = vector.load %arg5[%c0_66, %c0_67] : memref<64x32xf32, #tpu.memory_space<vmem>>, vector<64x32xf32>
    %cst_68 = arith.constant dense<0.000000e+00> : vector<128x32xf32>
    %137 = tpu.matmul %135, %136, %cst_68 {dimension_numbers = #tpu.dot_dimension_numbers<[1], [0], [0], [1], [0, 0, 1, 1], [], []>} : vector<128x64xf32>, vector<64x32xf32>, vector<128x32xf32> -> vector<128x32xf32>
    %c0_69 = arith.constant 0 : index
    %c0_70 = arith.constant 0 : index
    %138 = vector.load %arg6[%c0_69, %c0_70] : memref<32x32xf32, #tpu.memory_space<vmem>>, vector<32x32xf32>
    %cst_71 = arith.constant dense<0.000000e+00> : vector<128x32xf32>
    %139 = tpu.matmul %1, %138, %cst_71 {dimension_numbers = #tpu.dot_dimension_numbers<[1], [0], [0], [1], [0, 0, 1, 1], [], []>} : vector<128x32xf32>, vector<32x32xf32>, vector<128x32xf32> -> vector<128x32xf32>
    %140 = arith.addf %137, %139 : vector<128x32xf32>
    %c0_72 = arith.constant 0 : index
    %c0_73 = arith.constant 0 : index
    %141 = vector.load %arg13[%c0_72, %c0_73] : memref<128x32xf32, #tpu.memory_space<vmem>>, vector<128x32xf32>
    tpu.vector_store %arg13[%c0_72, %c0_73], %140 {strides = array<i32>} : memref<128x32xf32, #tpu.memory_space<vmem>>, vector<128x32xf32>,
    %c0_74 = arith.constant 0 : index
    %c0_75 = arith.constant 0 : index
    %142 = vector.load %arg13[%c0_74, %c0_75] : memref<128x32xf32, #tpu.memory_space<vmem>>, vector<16x32xf32>
    %c1_i32_76 = arith.constant 1 : i32
    %c16_i32_77 = arith.constant 16 : i32
    %143 = arith.muli %c1_i32_76, %c16_i32_77 : i32
    %144 = tpu.assume_multiple %143, 16 : i32
    %145 = arith.index_cast %144 : i32 to index
    %c0_78 = arith.constant 0 : index
    %146 = vector.load %arg13[%145, %c0_78] : memref<128x32xf32, #tpu.memory_space<vmem>>, vector<16x32xf32>
    %147 = arith.maximumf %142, %146 : vector<16x32xf32>
    %c2_i32_79 = arith.constant 2 : i32
    %c16_i32_80 = arith.constant 16 : i32
    %148 = arith.muli %c2_i32_79, %c16_i32_80 : i32
    %149 = tpu.assume_multiple %148, 16 : i32
    %150 = arith.index_cast %149 : i32 to index
    %c0_81 = arith.constant 0 : index
    %151 = vector.load %arg13[%150, %c0_81] : memref<128x32xf32, #tpu.memory_space<vmem>>, vector<16x32xf32>
    %152 = arith.maximumf %147, %151 : vector<16x32xf32>
    %c3_i32_82 = arith.constant 3 : i32
    %c16_i32_83 = arith.constant 16 : i32
    %153 = arith.muli %c3_i32_82, %c16_i32_83 : i32
    %154 = tpu.assume_multiple %153, 16 : i32
    %155 = arith.index_cast %154 : i32 to index
    %c0_84 = arith.constant 0 : index
    %156 = vector.load %arg13[%155, %c0_84] : memref<128x32xf32, #tpu.memory_space<vmem>>, vector<16x32xf32>
    %157 = arith.maximumf %152, %156 : vector<16x32xf32>
    %c4_i32_85 = arith.constant 4 : i32
    %c16_i32_86 = arith.constant 16 : i32
    %158 = arith.muli %c4_i32_85, %c16_i32_86 : i32
    %159 = tpu.assume_multiple %158, 16 : i32
    %160 = arith.index_cast %159 : i32 to index
    %c0_87 = arith.constant 0 : index
    %161 = vector.load %arg13[%160, %c0_87] : memref<128x32xf32, #tpu.memory_space<vmem>>, vector<16x32xf32>
    %162 = arith.maximumf %157, %161 : vector<16x32xf32>
    %c5_i32_88 = arith.constant 5 : i32
    %c16_i32_89 = arith.constant 16 : i32
    %163 = arith.muli %c5_i32_88, %c16_i32_89 : i32
    %164 = tpu.assume_multiple %163, 16 : i32
    %165 = arith.index_cast %164 : i32 to index
    %c0_90 = arith.constant 0 : index
    %166 = vector.load %arg13[%165, %c0_90] : memref<128x32xf32, #tpu.memory_space<vmem>>, vector<16x32xf32>
    %167 = arith.maximumf %162, %166 : vector<16x32xf32>
    %c6_i32_91 = arith.constant 6 : i32
    %c16_i32_92 = arith.constant 16 : i32
    %168 = arith.muli %c6_i32_91, %c16_i32_92 : i32
    %169 = tpu.assume_multiple %168, 16 : i32
    %170 = arith.index_cast %169 : i32 to index
    %c0_93 = arith.constant 0 : index
    %171 = vector.load %arg13[%170, %c0_93] : memref<128x32xf32, #tpu.memory_space<vmem>>, vector<16x32xf32>
    %172 = arith.maximumf %167, %171 : vector<16x32xf32>
    %c7_i32_94 = arith.constant 7 : i32
    %c16_i32_95 = arith.constant 16 : i32
    %173 = arith.muli %c7_i32_94, %c16_i32_95 : i32
    %174 = tpu.assume_multiple %173, 16 : i32
    %175 = arith.index_cast %174 : i32 to index
    %c0_96 = arith.constant 0 : index
    %176 = vector.load %arg13[%175, %c0_96] : memref<128x32xf32, #tpu.memory_space<vmem>>, vector<16x32xf32>
    %177 = arith.maximumf %172, %176 : vector<16x32xf32>
    %c7_i32_97 = arith.constant 7 : i32
    %c0_98 = arith.constant 0 : index
    %c0_99 = arith.constant 0 : index
    %178 = vector.load %arg7[%c0_98, %c0_99] : memref<1x32xf32, #tpu.memory_space<vmem>>, vector<1x32xf32>
    %179 = vector.broadcast %178 : vector<1x32xf32> to vector<16x32xf32>
    %180 = arith.addf %177, %179 : vector<16x32xf32>
    %c0_100 = arith.constant 0 : index
    %c0_101 = arith.constant 0 : index
    %181 = vector.load %arg8[%c0_100, %c0_101] : memref<32x4xf32, #tpu.memory_space<vmem>>, vector<32x4xf32>
    %cst_102 = arith.constant dense<0.000000e+00> : vector<16x4xf32>
    %182 = tpu.matmul %180, %181, %cst_102 {dimension_numbers = #tpu.dot_dimension_numbers<[1], [0], [0], [1], [0, 0, 1, 1], [], []>} : vector<16x32xf32>, vector<32x4xf32>, vector<16x4xf32> -> vector<16x4xf32>
    %c0_103 = arith.constant 0 : index
    %c0_104 = arith.constant 0 : index
    %183 = vector.load %arg9[%c0_103, %c0_104] : memref<1x4xf32, #tpu.memory_space<vmem>>, vector<1x4xf32>
    %184 = vector.broadcast %183 : vector<1x4xf32> to vector<16x4xf32>
    %185 = arith.addf %182, %184 : vector<16x4xf32>
    %c0_105 = arith.constant 0 : index
    %c0_106 = arith.constant 0 : index
    %186 = vector.load %arg10[%c0_105, %c0_106] : memref<16x4xf32, #tpu.memory_space<vmem>>, vector<16x4xf32>
    tpu.vector_store %arg10[%c0_105, %c0_106], %185 {strides = array<i32>} : memref<16x4xf32, #tpu.memory_space<vmem>>, vector<16x4xf32>,
    return
  }
  func.func @transform_0(%arg0: i32) -> (i32, i32, i32) {
    %c0_i32 = arith.constant 0 : i32
    %c0_i32_0 = arith.constant 0 : i32
    %c0_i32_1 = arith.constant 0 : i32
    return %arg0, %c0_i32, %c0_i32_0 : i32, i32, i32
  }
  func.func @transform_1(%arg0: i32) -> (i32, i32) {
    %c0_i32 = arith.constant 0 : i32
    %c0_i32_0 = arith.constant 0 : i32
    return %arg0, %c0_i32 : i32, i32
  }
  func.func @transform_2(%arg0: i32) -> (i32, i32) {
    %c0_i32 = arith.constant 0 : i32
    %c0_i32_0 = arith.constant 0 : i32
    %c0_i32_1 = arith.constant 0 : i32
    return %c0_i32, %c0_i32_0 : i32, i32
  }
  func.func @transform_3(%arg0: i32) -> (i32, i32) {
    %c0_i32 = arith.constant 0 : i32
    %c0_i32_0 = arith.constant 0 : i32
    %c0_i32_1 = arith.constant 0 : i32
    return %c0_i32, %c0_i32_0 : i32, i32
  }
  func.func @transform_4(%arg0: i32) -> (i32, i32) {
    %c0_i32 = arith.constant 0 : i32
    %c0_i32_0 = arith.constant 0 : i32
    %c0_i32_1 = arith.constant 0 : i32
    return %c0_i32, %c0_i32_0 : i32, i32
  }
  func.func @transform_5(%arg0: i32) -> (i32, i32) {
    %c0_i32 = arith.constant 0 : i32
    %c0_i32_0 = arith.constant 0 : i32
    %c0_i32_1 = arith.constant 0 : i32
    return %c0_i32, %c0_i32_0 : i32, i32
  }
  func.func @transform_6(%arg0: i32) -> (i32, i32) {
    %c0_i32 = arith.constant 0 : i32
    %c0_i32_0 = arith.constant 0 : i32
    %c0_i32_1 = arith.constant 0 : i32
    return %c0_i32, %c0_i32_0 : i32, i32
  }
  func.func @transform_7(%arg0: i32) -> (i32, i32) {
    %c0_i32 = arith.constant 0 : i32
    %c0_i32_0 = arith.constant 0 : i32
    %c0_i32_1 = arith.constant 0 : i32
    return %c0_i32, %c0_i32_0 : i32, i32
  }
  func.func @transform_8(%arg0: i32) -> (i32, i32) {
    %c0_i32 = arith.constant 0 : i32
    %c0_i32_0 = arith.constant 0 : i32
    %c0_i32_1 = arith.constant 0 : i32
    return %c0_i32, %c0_i32_0 : i32, i32
  }
  func.func @transform_9(%arg0: i32) -> (i32, i32) {
    %c0_i32 = arith.constant 0 : i32
    %c0_i32_0 = arith.constant 0 : i32
    return %arg0, %c0_i32 : i32, i32
  }
}

</mosaic_0001>

<llo_original>
// kernel: tpu_custom_call.1
$region0: #{tpu_custom_call.1}
  #allocation0 [shape = 'u32[]', space=smem, size = 0x4, offset = 0x4, fixed_abs, tag = 'smem constant byte address 0x4 - core index']
  #allocation1 [shape = 'u32[144,128]{1,0:T(1,128)}', space=vmem, size = 0x12000, scoped, tag = 'internal scratch']
  #allocation2 [shape = 'f32[128,64]{1,0:T(8,128)}', space=vmem, size = 0x10000, scoped, tag = 'scratch operand']
  #allocation3 [shape = 'f32[128,64]{1,0:T(8,128)}', space=vmem, size = 0x10000, scoped, tag = 'scratch operand']
  #allocation4 [shape = 'f32[128,32]{1,0:T(8,128)}', space=vmem, size = 0x10000, scoped, tag = 'scratch operand']
  %s0 = inlined_call_operand.vmem [shape: f32[1,128,32], index: 0, kind: input, shape index: {}]
  %s1 = inlined_call_operand.vmem [shape: f32[16,64], index: 1, kind: input, shape index: {}]
  %s2 = inlined_call_operand.vmem [shape: f32[32,64], index: 2, kind: input, shape index: {}]
  %s3 = inlined_call_operand.vmem [shape: f32[64,64], index: 3, kind: input, shape index: {}]
  %s4 = inlined_call_operand.vmem [shape: f32[64,32], index: 4, kind: input, shape index: {}]
  %s5 = inlined_call_operand.vmem [shape: f32[32,32], index: 5, kind: input, shape index: {}]
  %s6 = inlined_call_operand.vmem [shape: f32[1,32], index: 6, kind: input, shape index: {}]
  %s7 = inlined_call_operand.vmem [shape: f32[32,4], index: 7, kind: input, shape index: {}]
  %s8 = inlined_call_operand.vmem [shape: f32[1,4], index: 8, kind: input, shape index: {}]
  %s9 = inlined_call_operand.vmem [shape: f32[16,4], index: 9, kind: output, shape index: {}]
  %s10 = sld [smem:[#allocation0]]
  $region46: #{tpu_custom_call.1} parent=0
    _
  %s12 = ssub.s32 1, %s10
  %s13 = scalar_select 0, %s12, %s10
  // Predicated region
  $region2: #{tpu_custom_call.1} parent=0 // pred_check
    _
  $region3: #{tpu_custom_call.1} parent=0 // pred_check_branch
    %15 = sbr.rel (0) target = $region5
  $region4: #{tpu_custom_call.1} parent=0 // pred_region
    _
  $region5: #{tpu_custom_call.1} parent=0 // pred_fallthru
    _
  // Predicated region
  $region6: #{tpu_custom_call.1} parent=0 // pred_check
    _
  $region7: #{tpu_custom_call.1} parent=0 // pred_check_branch
    %17 = sbr.rel (0) target = $region9
  $region8: #{tpu_custom_call.1} parent=0 // pred_region
    _
  $region9: #{tpu_custom_call.1} parent=0 // pred_fallthru
    _
  // Predicated region
  $region10: #{tpu_custom_call.1} parent=0 // pred_check
    _
  $region11: #{tpu_custom_call.1} parent=0 // pred_check_branch
    %19 = sbr.rel (0) target = $region13
  $region12: #{tpu_custom_call.1} parent=0 // pred_region
    _
  $region13: #{tpu_custom_call.1} parent=0 // pred_fallthru
    _
  // Predicated region
  $region14: #{tpu_custom_call.1} parent=0 // pred_check
    _
  $region15: #{tpu_custom_call.1} parent=0 // pred_check_branch
    %21 = sbr.rel (0) target = $region17
  $region16: #{tpu_custom_call.1} parent=0 // pred_region
    _
  $region17: #{tpu_custom_call.1} parent=0 // pred_fallthru
    _
  // Predicated region
  $region18: #{tpu_custom_call.1} parent=0 // pred_check
    _
  $region19: #{tpu_custom_call.1} parent=0 // pred_check_branch
    %23 = sbr.rel (0) target = $region21
  $region20: #{tpu_custom_call.1} parent=0 // pred_region
    _
  $region21: #{tpu_custom_call.1} parent=0 // pred_fallthru
    _
  // Predicated region
  $region22: #{tpu_custom_call.1} parent=0 // pred_check
    _
  $region23: #{tpu_custom_call.1} parent=0 // pred_check_branch
    %25 = sbr.rel (0) target = $region25
  $region24: #{tpu_custom_call.1} parent=0 // pred_region
    _
  $region25: #{tpu_custom_call.1} parent=0 // pred_fallthru
    _
  // Predicated region
  $region26: #{tpu_custom_call.1} parent=0 // pred_check
    _
  $region27: #{tpu_custom_call.1} parent=0 // pred_check_branch
    %27 = sbr.rel (0) target = $region29
  $region28: #{tpu_custom_call.1} parent=0 // pred_region
    _
  $region29: #{tpu_custom_call.1} parent=0 // pred_fallthru
    _
  // Predicated region
  $region30: #{tpu_custom_call.1} parent=0 // pred_check
    _
  $region31: #{tpu_custom_call.1} parent=0 // pred_check_branch
    %29 = sbr.rel (0) target = $region33
  $region32: #{tpu_custom_call.1} parent=0 // pred_region
    _
  $region33: #{tpu_custom_call.1} parent=0 // pred_fallthru
    _
  // Predicated region
  $region34: #{tpu_custom_call.1} parent=0 // pred_check
    _
  $region35: #{tpu_custom_call.1} parent=0 // pred_check_branch
    %31 = sbr.rel (0) target = $region37
  $region36: #{tpu_custom_call.1} parent=0 // pred_region
    _
  $region37: #{tpu_custom_call.1} parent=0 // pred_fallthru
    _
  %v32 = vld [vmem:[%s0] sm:$0xff]
  %v33 = vld [vmem:[%s0 + $0x8] sm:$0xff]
  %v34 = vld [vmem:[%s0 + $0x10] sm:$0xff]
  %v35 = vld [vmem:[%s0 + $0x18] sm:$0xff]
  %v36 = vld [vmem:[%s0 + $0x20] sm:$0xff]
  %v37 = vld [vmem:[%s0 + $0x28] sm:$0xff]
  %v38 = vld [vmem:[%s0 + $0x30] sm:$0xff]
  %v39 = vld [vmem:[%s0 + $0x38] sm:$0xff]
  %v40 = vld [vmem:[%s0 + $0x40] sm:$0xff]
  %v41 = vld [vmem:[%s0 + $0x48] sm:$0xff]
  %v42 = vld [vmem:[%s0 + $0x50] sm:$0xff]
  %v43 = vld [vmem:[%s0 + $0x58] sm:$0xff]
  %v44 = vld [vmem:[%s0 + $0x60] sm:$0xff]
  %v45 = vld [vmem:[%s0 + $0x68] sm:$0xff]
  %v46 = vld [vmem:[%s0 + $0x70] sm:$0xff]
  %v47 = vld [vmem:[%s0 + $0x78] sm:$0xff]
  %v48 = vld [vmem:[%s2] sm:$0xff]
  %v49 = vld [vmem:[%s2 + $0x8] sm:$0xff]
  %v50 = vld [vmem:[%s2 + $0x10] sm:$0xff]
  %v51 = vld [vmem:[%s2 + $0x18] sm:$0xff]
  %vm52 = vcmask 261120
  %v54 = vsel %vm52, %v32, 0
  %v57 = vsel %vm52, %v33, 0
  %v60 = vsel %vm52, %v34, 0
  %v63 = vsel %vm52, %v35, 0
  %v66 = vsel %vm52, %v36, 0
  %v69 = vsel %vm52, %v37, 0
  %v72 = vsel %vm52, %v38, 0
  %v75 = vsel %vm52, %v39, 0
  %v78 = vsel %vm52, %v40, 0
  %v81 = vsel %vm52, %v41, 0
  %v84 = vsel %vm52, %v42, 0
  %v87 = vsel %vm52, %v43, 0
  %v90 = vsel %vm52, %v44, 0
  %v93 = vsel %vm52, %v45, 0
  %v96 = vsel %vm52, %v46, 0
  %v99 = vsel %vm52, %v47, 0
  %101 = vmatprep.subr.mxu0 0.0
  %102 = vmatpush1.msra.mxu0 %v48
  %103 = vmatprep.subr.mxu0 0.0
  %104 = vmatpush1.msra.mxu0 %v49
  %105 = vmatprep.subr.mxu0 0.0
  %106 = vmatpush1.msra.mxu0 %v50
  %107 = vmatprep.subr.mxu0 0.0
  %108 = vmatpush1.msra.mxu0 %v51
  %109 = vmatprep.subr.mxu0 0.0
  %110 = vmatpush1.msra.mxu0 0.0
  %111 = vmatprep.subr.mxu0 0.0
  %112 = vmatpush1.msra.mxu0 0.0
  %113 = vmatprep.subr.mxu0 0.0
  %114 = vmatpush1.msra.mxu0 0.0
  %115 = vmatprep.subr.mxu0 0.0
  %116 = vmatpush1.msra.mxu0 0.0
  %117 = vmatprep.subr.mxu0 0.0
  %118 = vmatpush1.msra.mxu0 0.0
  %119 = vmatprep.subr.mxu0 0.0
  %120 = vmatpush1.msra.mxu0 0.0
  %121 = vmatprep.subr.mxu0 0.0
  %122 = vmatpush1.msra.mxu0 0.0
  %123 = vmatprep.subr.mxu0 0.0
  %124 = vmatpush1.msra.mxu0 0.0
  %125 = vmatprep.subr.mxu0 0.0
  %126 = vmatpush1.msra.mxu0 0.0
  %127 = vmatprep.subr.mxu0 0.0
  %128 = vmatpush1.msra.mxu0 0.0
  %129 = vmatprep.subr.mxu0 0.0
  %130 = vmatpush1.msra.mxu0 0.0
  %131 = vmatprep.subr.mxu0 0.0
  %132 = vmatpush1.msra.mxu0 0.0
  %133 = vmatprep.subr.mxu0 0.0
  %134 = vmatpush1.msra.mxu0 0.0
  %135 = vmatprep.subr.mxu0 0.0
  %136 = vmatpush1.msra.mxu0 0.0
  %137 = vmatprep.subr.mxu0 0.0
  %138 = vmatpush1.msra.mxu0 0.0
  %139 = vmatprep.subr.mxu0 0.0
  %140 = vmatpush1.msra.mxu0 0.0
  %141 = vmatprep.subr.mxu0 0.0
  %142 = vmatpush1.msra.mxu0 0.0
  %143 = vmatprep.subr.mxu0 0.0
  %144 = vmatpush1.msra.mxu0 0.0
  %145 = vmatprep.subr.mxu0 0.0
  %146 = vmatpush1.msra.mxu0 0.0
  %147 = vmatprep.subr.mxu0 0.0
  %148 = vmatpush1.msra.mxu0 0.0
  %149 = vmatprep.subr.mxu0 0.0
  %150 = vmatpush1.msra.mxu0 0.0
  %151 = vmatprep.subr.mxu0 0.0
  %152 = vmatpush1.msra.mxu0 0.0
  %153 = vmatprep.subr.mxu0 0.0
  %154 = vmatpush1.msra.mxu0 0.0
  %155 = vmatprep.subr.mxu0 0.0
  %156 = vmatpush1.msra.mxu0 0.0
  %157 = vmatprep.subr.mxu0 0.0
  %158 = vmatpush1.msra.mxu0 0.0
  %159 = vmatprep.subr.mxu0 0.0
  %160 = vmatpush1.msra.mxu0 0.0
  %161 = vmatprep.subr.mxu0 0.0
  %162 = vmatpush1.msra.mxu0 0.0
  %163 = vmatprep.subr.mxu0 0.0
  %164 = vmatpush1.msra.mxu0 0.0
  %165 = vmatprep.mubr.f32.mxu0 0.0
  %166 = vmatmul.mubr.f32.gmra.mrb[0].mxu0 %v54
  %v167 = vpop.f32.mrb[0].mxu0
  %v168 = vadd.f32 0.0, %v167
  %v169 = vpop.f32.mrb[0].mxu0
  %170 = vmatprep.mubr.f32.mxu0 0.0
  %171 = vmatmul.mubr.f32.gmra.mrb[0].mxu0 %v57
  %v172 = vpop.f32.mrb[0].mxu0
  %v173 = vadd.f32 0.0, %v172
  %v174 = vpop.f32.mrb[0].mxu0
  %175 = vmatprep.mubr.f32.mxu0 0.0
  %176 = vmatmul.mubr.f32.gmra.mrb[0].mxu0 %v60
  %v177 = vpop.f32.mrb[0].mxu0
  %v178 = vadd.f32 0.0, %v177
  %v179 = vpop.f32.mrb[0].mxu0
  %180 = vmatprep.mubr.f32.mxu0 0.0
  %181 = vmatmul.mubr.f32.gmra.mrb[0].mxu0 %v63
  %v182 = vpop.f32.mrb[0].mxu0
  %v183 = vadd.f32 0.0, %v182
  %v184 = vpop.f32.mrb[0].mxu0
  %185 = vmatprep.mubr.f32.mxu0 0.0
  %186 = vmatmul.mubr.f32.gmra.mrb[0].mxu0 %v66
  %v187 = vpop.f32.mrb[0].mxu0
  %v188 = vadd.f32 0.0, %v187
  %v189 = vpop.f32.mrb[0].mxu0
  %190 = vmatprep.mubr.f32.mxu0 0.0
  %191 = vmatmul.mubr.f32.gmra.mrb[0].mxu0 %v69
  %v192 = vpop.f32.mrb[0].mxu0
  %v193 = vadd.f32 0.0, %v192
  %v194 = vpop.f32.mrb[0].mxu0
  %195 = vmatprep.mubr.f32.mxu0 0.0
  %196 = vmatmul.mubr.f32.gmra.mrb[0].mxu0 %v72
  %v197 = vpop.f32.mrb[0].mxu0
  %v198 = vadd.f32 0.0, %v197
  %v199 = vpop.f32.mrb[0].mxu0
  %200 = vmatprep.mubr.f32.mxu0 0.0
  %201 = vmatmul.mubr.f32.gmra.mrb[0].mxu0 %v75
  %v202 = vpop.f32.mrb[0].mxu0
  %v203 = vadd.f32 0.0, %v202
  %v204 = vpop.f32.mrb[0].mxu0
  %205 = vmatprep.mubr.f32.mxu0 0.0
  %206 = vmatmul.mubr.f32.gmra.mrb[0].mxu0 %v78
  %v207 = vpop.f32.mrb[0].mxu0
  %v208 = vadd.f32 0.0, %v207
  %v209 = vpop.f32.mrb[0].mxu0
  %210 = vmatprep.mubr.f32.mxu0 0.0
  %211 = vmatmul.mubr.f32.gmra.mrb[0].mxu0 %v81
  %v212 = vpop.f32.mrb[0].mxu0
  %v213 = vadd.f32 0.0, %v212
  %v214 = vpop.f32.mrb[0].mxu0
  %215 = vmatprep.mubr.f32.mxu0 0.0
  %216 = vmatmul.mubr.f32.gmra.mrb[0].mxu0 %v84
  %v217 = vpop.f32.mrb[0].mxu0
  %v218 = vadd.f32 0.0, %v217
  %v219 = vpop.f32.mrb[0].mxu0
  %220 = vmatprep.mubr.f32.mxu0 0.0
  %221 = vmatmul.mubr.f32.gmra.mrb[0].mxu0 %v87
  %v222 = vpop.f32.mrb[0].mxu0
  %v223 = vadd.f32 0.0, %v222
  %v224 = vpop.f32.mrb[0].mxu0
  %225 = vmatprep.mubr.f32.mxu0 0.0
  %226 = vmatmul.mubr.f32.gmra.mrb[0].mxu0 %v90
  %v227 = vpop.f32.mrb[0].mxu0
  %v228 = vadd.f32 0.0, %v227
  %v229 = vpop.f32.mrb[0].mxu0
  %230 = vmatprep.mubr.f32.mxu0 0.0
  %231 = vmatmul.mubr.f32.gmra.mrb[0].mxu0 %v93
  %v232 = vpop.f32.mrb[0].mxu0
  %v233 = vadd.f32 0.0, %v232
  %v234 = vpop.f32.mrb[0].mxu0
  %235 = vmatprep.mubr.f32.mxu0 0.0
  %236 = vmatmul.mubr.f32.gmra.mrb[0].mxu0 %v96
  %v237 = vpop.f32.mrb[0].mxu0
  %v238 = vadd.f32 0.0, %v237
  %v239 = vpop.f32.mrb[0].mxu0
  %240 = vmatprep.mubr.f32.mxu0 0.0
  %241 = vmatmul.mubr.f32.gmra.mrb[0].mxu0 %v99
  %v242 = vpop.f32.mrb[0].mxu0
  %v243 = vadd.f32 0.0, %v242
  %v244 = vpop.f32.mrb[0].mxu0
  %245 = vdwg.mxu0
  %vm246 = vcmask 523264
  %247 = vst.msk [vmem:[#allocation2] sm:$0xff] %vm246, %v168
  %248 = vst.msk [vmem:[#allocation2 + $0x8] sm:$0xff] %vm246, %v173
  %249 = vst.msk [vmem:[#allocation2 + $0x10] sm:$0xff] %vm246, %v178
  %250 = vst.msk [vmem:[#allocation2 + $0x18] sm:$0xff] %vm246, %v183
  %251 = vst.msk [vmem:[#allocation2 + $0x20] sm:$0xff] %vm246, %v188
  %252 = vst.msk [vmem:[#allocation2 + $0x28] sm:$0xff] %vm246, %v193
  %253 = vst.msk [vmem:[#allocation2 + $0x30] sm:$0xff] %vm246, %v198
  %254 = vst.msk [vmem:[#allocation2 + $0x38] sm:$0xff] %vm246, %v203
  %255 = vst.msk [vmem:[#allocation2 + $0x40] sm:$0xff] %vm246, %v208
  %256 = vst.msk [vmem:[#allocation2 + $0x48] sm:$0xff] %vm246, %v213
  %257 = vst.msk [vmem:[#allocation2 + $0x50] sm:$0xff] %vm246, %v218
  %258 = vst.msk [vmem:[#allocation2 + $0x58] sm:$0xff] %vm246, %v223
  %259 = vst.msk [vmem:[#allocation2 + $0x60] sm:$0xff] %vm246, %v228
  %260 = vst.msk [vmem:[#allocation2 + $0x68] sm:$0xff] %vm246, %v233
  %261 = vst.msk [vmem:[#allocation2 + $0x70] sm:$0xff] %vm246, %v238
  %262 = vst.msk [vmem:[#allocation2 + $0x78] sm:$0xff] %vm246, %v243
  %v263 = vld [vmem:[%s3] sm:$0xff]
  %v264 = vld [vmem:[%s3 + $0x8] sm:$0xff]
  %v265 = vld [vmem:[%s3 + $0x10] sm:$0xff]
  %v266 = vld [vmem:[%s3 + $0x18] sm:$0xff]
  %v267 = vld [vmem:[%s3 + $0x20] sm:$0xff]
  %v268 = vld [vmem:[%s3 + $0x28] sm:$0xff]
  %v269 = vld [vmem:[%s3 + $0x30] sm:$0xff]
  %v270 = vld [vmem:[%s3 + $0x38] sm:$0xff]
  %v271 = vld [vmem:[%s1] sm:$0xff]
  %v272 = vld [vmem:[%s1 + $0x8] sm:$0xff]
  %v273 = vld [vmem:[#allocation2] sm:$0xff]
  %v274 = vld [vmem:[#allocation2 + $0x8] sm:$0xff]
  %v276 = vsel %vm246, %v271, 0
  %v279 = vsel %vm246, %v272, 0
  %281 = vmatprep.subr.mxu0 0.0
  %282 = vmatpush1.msra.mxu0 %v263
  %283 = vmatprep.subr.mxu0 0.0
  %284 = vmatpush1.msra.mxu0 %v264
  %285 = vmatprep.subr.mxu0 0.0
  %286 = vmatpush1.msra.mxu0 %v265
  %287 = vmatprep.subr.mxu0 0.0
  %288 = vmatpush1.msra.mxu0 %v266
  %289 = vmatprep.subr.mxu0 0.0
  %290 = vmatpush1.msra.mxu0 %v267
  %291 = vmatprep.subr.mxu0 0.0
  %292 = vmatpush1.msra.mxu0 %v268
  %293 = vmatprep.subr.mxu0 0.0
  %294 = vmatpush1.msra.mxu0 %v269
  %295 = vmatprep.subr.mxu0 0.0
  %296 = vmatpush1.msra.mxu0 %v270
  %297 = vmatprep.subr.mxu0 0.0
  %298 = vmatpush1.msra.mxu0 0.0
  %299 = vmatprep.subr.mxu0 0.0
  %300 = vmatpush1.msra.mxu0 0.0
  %301 = vmatprep.subr.mxu0 0.0
  %302 = vmatpush1.msra.mxu0 0.0
  %303 = vmatprep.subr.mxu0 0.0
  %304 = vmatpush1.msra.mxu0 0.0
  %305 = vmatprep.subr.mxu0 0.0
  %306 = vmatpush1.msra.mxu0 0.0
  %307 = vmatprep.subr.mxu0 0.0
  %308 = vmatpush1.msra.mxu0 0.0
  %309 = vmatprep.subr.mxu0 0.0
  %310 = vmatpush1.msra.mxu0 0.0
  %311 = vmatprep.subr.mxu0 0.0
  %312 = vmatpush1.msra.mxu0 0.0
  %313 = vmatprep.subr.mxu0 0.0
  %314 = vmatpush1.msra.mxu0 0.0
  %315 = vmatprep.subr.mxu0 0.0
  %316 = vmatpush1.msra.mxu0 0.0
  %317 = vmatprep.subr.mxu0 0.0
  %318 = vmatpush1.msra.mxu0 0.0
  %319 = vmatprep.subr.mxu0 0.0
  %320 = vmatpush1.msra.mxu0 0.0
  %321 = vmatprep.subr.mxu0 0.0
  %322 = vmatpush1.msra.mxu0 0.0
  %323 = vmatprep.subr.mxu0 0.0
  %324 = vmatpush1.msra.mxu0 0.0
  %325 = vmatprep.subr.mxu0 0.0
  %326 = vmatpush1.msra.mxu0 0.0
  %327 = vmatprep.subr.mxu0 0.0
  %328 = vmatpush1.msra.mxu0 0.0
  %329 = vmatprep.subr.mxu0 0.0
  %330 = vmatpush1.msra.mxu0 0.0
  %331 = vmatprep.subr.mxu0 0.0
  %332 = vmatpush1.msra.mxu0 0.0
  %333 = vmatprep.subr.mxu0 0.0
  %334 = vmatpush1.msra.mxu0 0.0
  %335 = vmatprep.subr.mxu0 0.0
  %336 = vmatpush1.msra.mxu0 0.0
  %337 = vmatprep.subr.mxu0 0.0
  %338 = vmatpush1.msra.mxu0 0.0
  %339 = vmatprep.subr.mxu0 0.0
  %340 = vmatpush1.msra.mxu0 0.0
  %341 = vmatprep.subr.mxu0 0.0
  %342 = vmatpush1.msra.mxu0 0.0
  %343 = vmatprep.subr.mxu0 0.0
  %344 = vmatpush1.msra.mxu0 0.0
  %345 = vmatprep.mubr.f32.mxu0 0.0
  %346 = vmatmul.mubr.f32.gmra.mrb[0].mxu0 %v276
  %v347 = vpop.f32.mrb[0].mxu0
  %v348 = vadd.f32 0.0, %v347
  %v349 = vpop.f32.mrb[0].mxu0
  %350 = vmatprep.mubr.f32.mxu0 0.0
  %351 = vmatmul.mubr.f32.gmra.mrb[0].mxu0 %v279
  %v352 = vpop.f32.mrb[0].mxu0
  %v353 = vadd.f32 0.0, %v352
  %v354 = vpop.f32.mrb[0].mxu0
  %355 = vdwg.mxu0
  %v356 = vadd.f32 %v273, %v348
  %v357 = vadd.f32 %v274, %v353
  %v358 = vtanh.pop %v356
  %v359 = vtanh.pop %v357
  %360 = vst.msk [vmem:[#allocation3] sm:$0xff] %vm52, %v358
  %361 = vst.msk [vmem:[#allocation3 + $0x8] sm:$0xff] %vm52, %v359
  %s362 = scalar_lea.vmem [#allocation3], 112
  %vm363 = vcmask 523520
  %364 = vst.msk [vmem:[%s362] sm:$0xff] %vm363, %v358
  %365 = vst.msk [vmem:[%s362 + $0x8] sm:$0xff] %vm363, %v359
  %s366 = scalar_lea.vmem [#allocation2], 16
  %v367 = vld [vmem:[%s366] sm:$0xff]
  %v368 = vld [vmem:[%s366 + $0x8] sm:$0xff]
  %v370 = vsel %vm246, %v358, 0
  %v373 = vsel %vm246, %v359, 0
  %375 = vmatprep.subr.mxu0 0.0
  %376 = vmatpush1.msra.mxu0 %v263
  %377 = vmatprep.subr.mxu0 0.0
  %378 = vmatpush1.msra.mxu0 %v264
  %379 = vmatprep.subr.mxu0 0.0
  %380 = vmatpush1.msra.mxu0 %v265
  %381 = vmatprep.subr.mxu0 0.0
  %382 = vmatpush1.msra.mxu0 %v266
  %383 = vmatprep.subr.mxu0 0.0
  %384 = vmatpush1.msra.mxu0 %v267
  %385 = vmatprep.subr.mxu0 0.0
  %386 = vmatpush1.msra.mxu0 %v268
  %387 = vmatprep.subr.mxu0 0.0
  %388 = vmatpush1.msra.mxu0 %v269
  %389 = vmatprep.subr.mxu0 0.0
  %390 = vmatpush1.msra.mxu0 %v270
  %391 = vmatprep.subr.mxu0 0.0
  %392 = vmatpush1.msra.mxu0 0.0
  %393 = vmatprep.subr.mxu0 0.0
  %394 = vmatpush1.msra.mxu0 0.0
  %395 = vmatprep.subr.mxu0 0.0
  %396 = vmatpush1.msra.mxu0 0.0
  %397 = vmatprep.subr.mxu0 0.0
  %398 = vmatpush1.msra.mxu0 0.0
  %399 = vmatprep.subr.mxu0 0.0
  %400 = vmatpush1.msra.mxu0 0.0
  %401 = vmatprep.subr.mxu0 0.0
  %402 = vmatpush1.msra.mxu0 0.0
  %403 = vmatprep.subr.mxu0 0.0
  %404 = vmatpush1.msra.mxu0 0.0
  %405 = vmatprep.subr.mxu0 0.0
  %406 = vmatpush1.msra.mxu0 0.0
  %407 = vmatprep.subr.mxu0 0.0
  %408 = vmatpush1.msra.mxu0 0.0
  %409 = vmatprep.subr.mxu0 0.0
  %410 = vmatpush1.msra.mxu0 0.0
  %411 = vmatprep.subr.mxu0 0.0
  %412 = vmatpush1.msra.mxu0 0.0
  %413 = vmatprep.subr.mxu0 0.0
  %414 = vmatpush1.msra.mxu0 0.0
  %415 = vmatprep.subr.mxu0 0.0
  %416 = vmatpush1.msra.mxu0 0.0
  %417 = vmatprep.subr.mxu0 0.0
  %418 = vmatpush1.msra.mxu0 0.0
  %419 = vmatprep.subr.mxu0 0.0
  %420 = vmatpush1.msra.mxu0 0.0
  %421 = vmatprep.subr.mxu0 0.0
  %422 = vmatpush1.msra.mxu0 0.0
  %423 = vmatprep.subr.mxu0 0.0
  %424 = vmatpush1.msra.mxu0 0.0
  %425 = vmatprep.subr.mxu0 0.0
  %426 = vmatpush1.msra.mxu0 0.0
  %427 = vmatprep.subr.mxu0 0.0
  %428 = vmatpush1.msra.mxu0 0.0
  %429 = vmatprep.subr.mxu0 0.0
  %430 = vmatpush1.msra.mxu0 0.0
  %431 = vmatprep.subr.mxu0 0.0
  %432 = vmatpush1.msra.mxu0 0.0
  %433 = vmatprep.subr.mxu0 0.0
  %434 = vmatpush1.msra.mxu0 0.0
  %435 = vmatprep.subr.mxu0 0.0
  %436 = vmatpush1.msra.mxu0 0.0
  %437 = vmatprep.subr.mxu0 0.0
  %438 = vmatpush1.msra.mxu0 0.0
  %439 = vmatprep.mubr.f32.mxu0 0.0
  %440 = vmatmul.mubr.f32.gmra.mrb[0].mxu0 %v370
  %v441 = vpop.f32.mrb[0].mxu0
  %v442 = vadd.f32 0.0, %v441
  %v443 = vpop.f32.mrb[0].mxu0
  %444 = vmatprep.mubr.f32.mxu0 0.0
  %445 = vmatmul.mubr.f32.gmra.mrb[0].mxu0 %v373
  %v446 = vpop.f32.mrb[0].mxu0
  %v447 = vadd.f32 0.0, %v446
  %v448 = vpop.f32.mrb[0].mxu0
  %449 = vdwg.mxu0
  %v450 = vadd.f32 %v367, %v442
  %v451 = vadd.f32 %v368, %v447
  %v452 = vtanh.pop %v450
  %v453 = vtanh.pop %v451
  %s454 = scalar_lea.vmem [#allocation3], 16
  %455 = vst.msk [vmem:[%s454] sm:$0xff] %vm52, %v452
  %456 = vst.msk [vmem:[%s454 + $0x8] sm:$0xff] %vm52, %v453
  %s457 = scalar_lea.vmem [#allocation3], 96
  %458 = vst.msk [vmem:[%s457] sm:$0xff] %vm363, %v452
  %459 = vst.msk [vmem:[%s457 + $0x8] sm:$0xff] %vm363, %v453
  %s460 = scalar_lea.vmem [#allocation2], 32
  %v461 = vld [vmem:[%s460] sm:$0xff]
  %v462 = vld [vmem:[%s460 + $0x8] sm:$0xff]
  %v464 = vsel %vm246, %v452, 0
  %v467 = vsel %vm246, %v453, 0
  %469 = vmatprep.subr.mxu0 0.0
  %470 = vmatpush1.msra.mxu0 %v263
  %471 = vmatprep.subr.mxu0 0.0
  %472 = vmatpush1.msra.mxu0 %v264
  %473 = vmatprep.subr.mxu0 0.0
  %474 = vmatpush1.msra.mxu0 %v265
  %475 = vmatprep.subr.mxu0 0.0
  %476 = vmatpush1.msra.mxu0 %v266
  %477 = vmatprep.subr.mxu0 0.0
  %478 = vmatpush1.msra.mxu0 %v267
  %479 = vmatprep.subr.mxu0 0.0
  %480 = vmatpush1.msra.mxu0 %v268
  %481 = vmatprep.subr.mxu0 0.0
  %482 = vmatpush1.msra.mxu0 %v269
  %483 = vmatprep.subr.mxu0 0.0
  %484 = vmatpush1.msra.mxu0 %v270
  %485 = vmatprep.subr.mxu0 0.0
  %486 = vmatpush1.msra.mxu0 0.0
  %487 = vmatprep.subr.mxu0 0.0
  %488 = vmatpush1.msra.mxu0 0.0
  %489 = vmatprep.subr.mxu0 0.0
  %490 = vmatpush1.msra.mxu0 0.0
  %491 = vmatprep.subr.mxu0 0.0
  %492 = vmatpush1.msra.mxu0 0.0
  %493 = vmatprep.subr.mxu0 0.0
  %494 = vmatpush1.msra.mxu0 0.0
  %495 = vmatprep.subr.mxu0 0.0
  %496 = vmatpush1.msra.mxu0 0.0
  %497 = vmatprep.subr.mxu0 0.0
  %498 = vmatpush1.msra.mxu0 0.0
  %499 = vmatprep.subr.mxu0 0.0
  %500 = vmatpush1.msra.mxu0 0.0
  %501 = vmatprep.subr.mxu0 0.0
  %502 = vmatpush1.msra.mxu0 0.0
  %503 = vmatprep.subr.mxu0 0.0
  %504 = vmatpush1.msra.mxu0 0.0
  %505 = vmatprep.subr.mxu0 0.0
  %506 = vmatpush1.msra.mxu0 0.0
  %507 = vmatprep.subr.mxu0 0.0
  %508 = vmatpush1.msra.mxu0 0.0
  %509 = vmatprep.subr.mxu0 0.0
  %510 = vmatpush1.msra.mxu0 0.0
  %511 = vmatprep.subr.mxu0 0.0
  %512 = vmatpush1.msra.mxu0 0.0
  %513 = vmatprep.subr.mxu0 0.0
  %514 = vmatpush1.msra.mxu0 0.0
  %515 = vmatprep.subr.mxu0 0.0
  %516 = vmatpush1.msra.mxu0 0.0
  %517 = vmatprep.subr.mxu0 0.0
  %518 = vmatpush1.msra.mxu0 0.0
  %519 = vmatprep.subr.mxu0 0.0
  %520 = vmatpush1.msra.mxu0 0.0
  %521 = vmatprep.subr.mxu0 0.0
  %522 = vmatpush1.msra.mxu0 0.0
  %523 = vmatprep.subr.mxu0 0.0
  %524 = vmatpush1.msra.mxu0 0.0
  %525 = vmatprep.subr.mxu0 0.0
  %526 = vmatpush1.msra.mxu0 0.0
  %527 = vmatprep.subr.mxu0 0.0
  %528 = vmatpush1.msra.mxu0 0.0
  %529 = vmatprep.subr.mxu0 0.0
  %530 = vmatpush1.msra.mxu0 0.0
  %531 = vmatprep.subr.mxu0 0.0
  %532 = vmatpush1.msra.mxu0 0.0
  %533 = vmatprep.mubr.f32.mxu0 0.0
  %534 = vmatmul.mubr.f32.gmra.mrb[0].mxu0 %v464
  %v535 = vpop.f32.mrb[0].mxu0
  %v536 = vadd.f32 0.0, %v535
  %v537 = vpop.f32.mrb[0].mxu0
  %538 = vmatprep.mubr.f32.mxu0 0.0
  %539 = vmatmul.mubr.f32.gmra.mrb[0].mxu0 %v467
  %v540 = vpop.f32.mrb[0].mxu0
  %v541 = vadd.f32 0.0, %v540
  %v542 = vpop.f32.mrb[0].mxu0
  %543 = vdwg.mxu0
  %v544 = vadd.f32 %v461, %v536
  %v545 = vadd.f32 %v462, %v541
  %v546 = vtanh.pop %v544
  %v547 = vtanh.pop %v545
  %s548 = scalar_lea.vmem [#allocation3], 32
  %549 = vst.msk [vmem:[%s548] sm:$0xff] %vm52, %v546
  %550 = vst.msk [vmem:[%s548 + $0x8] sm:$0xff] %vm52, %v547
  %s551 = scalar_lea.vmem [#allocation3], 80
  %552 = vst.msk [vmem:[%s551] sm:$0xff] %vm363, %v546
  %553 = vst.msk [vmem:[%s551 + $0x8] sm:$0xff] %vm363, %v547
  %s554 = scalar_lea.vmem [#allocation2], 48
  %v555 = vld [vmem:[%s554] sm:$0xff]
  %v556 = vld [vmem:[%s554 + $0x8] sm:$0xff]
  %v558 = vsel %vm246, %v546, 0
  %v561 = vsel %vm246, %v547, 0
  %563 = vmatprep.subr.mxu0 0.0
  %564 = vmatpush1.msra.mxu0 %v263
  %565 = vmatprep.subr.mxu0 0.0
  %566 = vmatpush1.msra.mxu0 %v264
  %567 = vmatprep.subr.mxu0 0.0
  %568 = vmatpush1.msra.mxu0 %v265
  %569 = vmatprep.subr.mxu0 0.0
  %570 = vmatpush1.msra.mxu0 %v266
  %571 = vmatprep.subr.mxu0 0.0
  %572 = vmatpush1.msra.mxu0 %v267
  %573 = vmatprep.subr.mxu0 0.0
  %574 = vmatpush1.msra.mxu0 %v268
  %575 = vmatprep.subr.mxu0 0.0
  %576 = vmatpush1.msra.mxu0 %v269
  %577 = vmatprep.subr.mxu0 0.0
  %578 = vmatpush1.msra.mxu0 %v270
  %579 = vmatprep.subr.mxu0 0.0
  %580 = vmatpush1.msra.mxu0 0.0
  %581 = vmatprep.subr.mxu0 0.0
  %582 = vmatpush1.msra.mxu0 0.0
  %583 = vmatprep.subr.mxu0 0.0
  %584 = vmatpush1.msra.mxu0 0.0
  %585 = vmatprep.subr.mxu0 0.0
  %586 = vmatpush1.msra.mxu0 0.0
  %587 = vmatprep.subr.mxu0 0.0
  %588 = vmatpush1.msra.mxu0 0.0
  %589 = vmatprep.subr.mxu0 0.0
  %590 = vmatpush1.msra.mxu0 0.0
  %591 = vmatprep.subr.mxu0 0.0
  %592 = vmatpush1.msra.mxu0 0.0
  %593 = vmatprep.subr.mxu0 0.0
  %594 = vmatpush1.msra.mxu0 0.0
  %595 = vmatprep.subr.mxu0 0.0
  %596 = vmatpush1.msra.mxu0 0.0
  %597 = vmatprep.subr.mxu0 0.0
  %598 = vmatpush1.msra.mxu0 0.0
  %599 = vmatprep.subr.mxu0 0.0
  %600 = vmatpush1.msra.mxu0 0.0
  %601 = vmatprep.subr.mxu0 0.0
  %602 = vmatpush1.msra.mxu0 0.0
  %603 = vmatprep.subr.mxu0 0.0
  %604 = vmatpush1.msra.mxu0 0.0
  %605 = vmatprep.subr.mxu0 0.0
  %606 = vmatpush1.msra.mxu0 0.0
  %607 = vmatprep.subr.mxu0 0.0
  %608 = vmatpush1.msra.mxu0 0.0
  %609 = vmatprep.subr.mxu0 0.0
  %610 = vmatpush1.msra.mxu0 0.0
  %611 = vmatprep.subr.mxu0 0.0
  %612 = vmatpush1.msra.mxu0 0.0
  %613 = vmatprep.subr.mxu0 0.0
  %614 = vmatpush1.msra.mxu0 0.0
  %615 = vmatprep.subr.mxu0 0.0
  %616 = vmatpush1.msra.mxu0 0.0
  %617 = vmatprep.subr.mxu0 0.0
  %618 = vmatpush1.msra.mxu0 0.0
  %619 = vmatprep.subr.mxu0 0.0
  %620 = vmatpush1.msra.mxu0 0.0
  %621 = vmatprep.subr.mxu0 0.0
  %622 = vmatpush1.msra.mxu0 0.0
  %623 = vmatprep.subr.mxu0 0.0
  %624 = vmatpush1.msra.mxu0 0.0
  %625 = vmatprep.subr.mxu0 0.0
  %626 = vmatpush1.msra.mxu0 0.0
  %627 = vmatprep.mubr.f32.mxu0 0.0
  %628 = vmatmul.mubr.f32.gmra.mrb[0].mxu0 %v558
  %v629 = vpop.f32.mrb[0].mxu0
  %v630 = vadd.f32 0.0, %v629
  %v631 = vpop.f32.mrb[0].mxu0
  %632 = vmatprep.mubr.f32.mxu0 0.0
  %633 = vmatmul.mubr.f32.gmra.mrb[0].mxu0 %v561
  %v634 = vpop.f32.mrb[0].mxu0
  %v635 = vadd.f32 0.0, %v634
  %v636 = vpop.f32.mrb[0].mxu0
  %637 = vdwg.mxu0
  %v638 = vadd.f32 %v555, %v630
  %v639 = vadd.f32 %v556, %v635
  %v640 = vtanh.pop %v638
  %v641 = vtanh.pop %v639
  %s642 = scalar_lea.vmem [#allocation3], 48
  %643 = vst.msk [vmem:[%s642] sm:$0xff] %vm52, %v640
  %644 = vst.msk [vmem:[%s642 + $0x8] sm:$0xff] %vm52, %v641
  %s645 = scalar_lea.vmem [#allocation3], 64
  %646 = vst.msk [vmem:[%s645] sm:$0xff] %vm363, %v640
  %647 = vst.msk [vmem:[%s645 + $0x8] sm:$0xff] %vm363, %v641
  %s648 = scalar_lea.vmem [#allocation2], 64
  %v649 = vld [vmem:[%s648] sm:$0xff]
  %v650 = vld [vmem:[%s648 + $0x8] sm:$0xff]
  %v652 = vsel %vm246, %v640, 0
  %v655 = vsel %vm246, %v641, 0
  %657 = vmatprep.subr.mxu0 0.0
  %658 = vmatpush1.msra.mxu0 %v263
  %659 = vmatprep.subr.mxu0 0.0
  %660 = vmatpush1.msra.mxu0 %v264
  %661 = vmatprep.subr.mxu0 0.0
  %662 = vmatpush1.msra.mxu0 %v265
  %663 = vmatprep.subr.mxu0 0.0
  %664 = vmatpush1.msra.mxu0 %v266
  %665 = vmatprep.subr.mxu0 0.0
  %666 = vmatpush1.msra.mxu0 %v267
  %667 = vmatprep.subr.mxu0 0.0
  %668 = vmatpush1.msra.mxu0 %v268
  %669 = vmatprep.subr.mxu0 0.0
  %670 = vmatpush1.msra.mxu0 %v269
  %671 = vmatprep.subr.mxu0 0.0
  %672 = vmatpush1.msra.mxu0 %v270
  %673 = vmatprep.subr.mxu0 0.0
  %674 = vmatpush1.msra.mxu0 0.0
  %675 = vmatprep.subr.mxu0 0.0
  %676 = vmatpush1.msra.mxu0 0.0
  %677 = vmatprep.subr.mxu0 0.0
  %678 = vmatpush1.msra.mxu0 0.0
  %679 = vmatprep.subr.mxu0 0.0
  %680 = vmatpush1.msra.mxu0 0.0
  %681 = vmatprep.subr.mxu0 0.0
  %682 = vmatpush1.msra.mxu0 0.0
  %683 = vmatprep.subr.mxu0 0.0
  %684 = vmatpush1.msra.mxu0 0.0
  %685 = vmatprep.subr.mxu0 0.0
  %686 = vmatpush1.msra.mxu0 0.0
  %687 = vmatprep.subr.mxu0 0.0
  %688 = vmatpush1.msra.mxu0 0.0
  %689 = vmatprep.subr.mxu0 0.0
  %690 = vmatpush1.msra.mxu0 0.0
  %691 = vmatprep.subr.mxu0 0.0
  %692 = vmatpush1.msra.mxu0 0.0
  %693 = vmatprep.subr.mxu0 0.0
  %694 = vmatpush1.msra.mxu0 0.0
  %695 = vmatprep.subr.mxu0 0.0
  %696 = vmatpush1.msra.mxu0 0.0
  %697 = vmatprep.subr.mxu0 0.0
  %698 = vmatpush1.msra.mxu0 0.0
  %699 = vmatprep.subr.mxu0 0.0
  %700 = vmatpush1.msra.mxu0 0.0
  %701 = vmatprep.subr.mxu0 0.0
  %702 = vmatpush1.msra.mxu0 0.0
  %703 = vmatprep.subr.mxu0 0.0
  %704 = vmatpush1.msra.mxu0 0.0
  %705 = vmatprep.subr.mxu0 0.0
  %706 = vmatpush1.msra.mxu0 0.0
  %707 = vmatprep.subr.mxu0 0.0
  %708 = vmatpush1.msra.mxu0 0.0
  %709 = vmatprep.subr.mxu0 0.0
  %710 = vmatpush1.msra.mxu0 0.0
  %711 = vmatprep.subr.mxu0 0.0
  %712 = vmatpush1.msra.mxu0 0.0
  %713 = vmatprep.subr.mxu0 0.0
  %714 = vmatpush1.msra.mxu0 0.0
  %715 = vmatprep.subr.mxu0 0.0
  %716 = vmatpush1.msra.mxu0 0.0
  %717 = vmatprep.subr.mxu0 0.0
  %718 = vmatpush1.msra.mxu0 0.0
  %719 = vmatprep.subr.mxu0 0.0
  %720 = vmatpush1.msra.mxu0 0.0
  %721 = vmatprep.mubr.f32.mxu0 0.0
  %722 = vmatmul.mubr.f32.gmra.mrb[0].mxu0 %v652
  %v723 = vpop.f32.mrb[0].mxu0
  %v724 = vadd.f32 0.0, %v723
  %v725 = vpop.f32.mrb[0].mxu0
  %726 = vmatprep.mubr.f32.mxu0 0.0
  %727 = vmatmul.mubr.f32.gmra.mrb[0].mxu0 %v655
  %v728 = vpop.f32.mrb[0].mxu0
  %v729 = vadd.f32 0.0, %v728
  %v730 = vpop.f32.mrb[0].mxu0
  %731 = vdwg.mxu0
  %v732 = vadd.f32 %v649, %v724
  %v733 = vadd.f32 %v650, %v729
  %v734 = vtanh.pop %v732
  %v735 = vtanh.pop %v733
  %736 = vst.msk [vmem:[%s645] sm:$0xff] %vm52, %v734
  %737 = vst.msk [vmem:[%s645 + $0x8] sm:$0xff] %vm52, %v735
  %738 = vst.msk [vmem:[%s642] sm:$0xff] %vm363, %v734
  %739 = vst.msk [vmem:[%s642 + $0x8] sm:$0xff] %vm363, %v735
  %s740 = scalar_lea.vmem [#allocation2], 80
  %v741 = vld [vmem:[%s740] sm:$0xff]
  %v742 = vld [vmem:[%s740 + $0x8] sm:$0xff]
  %v744 = vsel %vm246, %v734, 0
  %v747 = vsel %vm246, %v735, 0
  %749 = vmatprep.subr.mxu0 0.0
  %750 = vmatpush1.msra.mxu0 %v263
  %751 = vmatprep.subr.mxu0 0.0
  %752 = vmatpush1.msra.mxu0 %v264
  %753 = vmatprep.subr.mxu0 0.0
  %754 = vmatpush1.msra.mxu0 %v265
  %755 = vmatprep.subr.mxu0 0.0
  %756 = vmatpush1.msra.mxu0 %v266
  %757 = vmatprep.subr.mxu0 0.0
  %758 = vmatpush1.msra.mxu0 %v267
  %759 = vmatprep.subr.mxu0 0.0
  %760 = vmatpush1.msra.mxu0 %v268
  %761 = vmatprep.subr.mxu0 0.0
  %762 = vmatpush1.msra.mxu0 %v269
  %763 = vmatprep.subr.mxu0 0.0
  %764 = vmatpush1.msra.mxu0 %v270
  %765 = vmatprep.subr.mxu0 0.0
  %766 = vmatpush1.msra.mxu0 0.0
  %767 = vmatprep.subr.mxu0 0.0
  %768 = vmatpush1.msra.mxu0 0.0
  %769 = vmatprep.subr.mxu0 0.0
  %770 = vmatpush1.msra.mxu0 0.0
  %771 = vmatprep.subr.mxu0 0.0
  %772 = vmatpush1.msra.mxu0 0.0
  %773 = vmatprep.subr.mxu0 0.0
  %774 = vmatpush1.msra.mxu0 0.0
  %775 = vmatprep.subr.mxu0 0.0
  %776 = vmatpush1.msra.mxu0 0.0
  %777 = vmatprep.subr.mxu0 0.0
  %778 = vmatpush1.msra.mxu0 0.0
  %779 = vmatprep.subr.mxu0 0.0
  %780 = vmatpush1.msra.mxu0 0.0
  %781 = vmatprep.subr.mxu0 0.0
  %782 = vmatpush1.msra.mxu0 0.0
  %783 = vmatprep.subr.mxu0 0.0
  %784 = vmatpush1.msra.mxu0 0.0
  %785 = vmatprep.subr.mxu0 0.0
  %786 = vmatpush1.msra.mxu0 0.0
  %787 = vmatprep.subr.mxu0 0.0
  %788 = vmatpush1.msra.mxu0 0.0
  %789 = vmatprep.subr.mxu0 0.0
  %790 = vmatpush1.msra.mxu0 0.0
  %791 = vmatprep.subr.mxu0 0.0
  %792 = vmatpush1.msra.mxu0 0.0
  %793 = vmatprep.subr.mxu0 0.0
  %794 = vmatpush1.msra.mxu0 0.0
  %795 = vmatprep.subr.mxu0 0.0
  %796 = vmatpush1.msra.mxu0 0.0
  %797 = vmatprep.subr.mxu0 0.0
  %798 = vmatpush1.msra.mxu0 0.0
  %799 = vmatprep.subr.mxu0 0.0
  %800 = vmatpush1.msra.mxu0 0.0
  %801 = vmatprep.subr.mxu0 0.0
  %802 = vmatpush1.msra.mxu0 0.0
  %803 = vmatprep.subr.mxu0 0.0
  %804 = vmatpush1.msra.mxu0 0.0
  %805 = vmatprep.subr.mxu0 0.0
  %806 = vmatpush1.msra.mxu0 0.0
  %807 = vmatprep.subr.mxu0 0.0
  %808 = vmatpush1.msra.mxu0 0.0
  %809 = vmatprep.subr.mxu0 0.0
  %810 = vmatpush1.msra.mxu0 0.0
  %811 = vmatprep.subr.mxu0 0.0
  %812 = vmatpush1.msra.mxu0 0.0
  %813 = vmatprep.mubr.f32.mxu0 0.0
  %814 = vmatmul.mubr.f32.gmra.mrb[0].mxu0 %v744
  %v815 = vpop.f32.mrb[0].mxu0
  %v816 = vadd.f32 0.0, %v815
  %v817 = vpop.f32.mrb[0].mxu0
  %818 = vmatprep.mubr.f32.mxu0 0.0
  %819 = vmatmul.mubr.f32.gmra.mrb[0].mxu0 %v747
  %v820 = vpop.f32.mrb[0].mxu0
  %v821 = vadd.f32 0.0, %v820
  %v822 = vpop.f32.mrb[0].mxu0
  %823 = vdwg.mxu0
  %v824 = vadd.f32 %v741, %v816
  %v825 = vadd.f32 %v742, %v821
  %v826 = vtanh.pop %v824
  %v827 = vtanh.pop %v825
  %828 = vst.msk [vmem:[%s551] sm:$0xff] %vm52, %v826
  %829 = vst.msk [vmem:[%s551 + $0x8] sm:$0xff] %vm52, %v827
  %830 = vst.msk [vmem:[%s548] sm:$0xff] %vm363, %v826
  %831 = vst.msk [vmem:[%s548 + $0x8] sm:$0xff] %vm363, %v827
  %s832 = scalar_lea.vmem [#allocation2], 96
  %v833 = vld [vmem:[%s832] sm:$0xff]
  %v834 = vld [vmem:[%s832 + $0x8] sm:$0xff]
  %v836 = vsel %vm246, %v826, 0
  %v839 = vsel %vm246, %v827, 0
  %841 = vmatprep.subr.mxu0 0.0
  %842 = vmatpush1.msra.mxu0 %v263
  %843 = vmatprep.subr.mxu0 0.0
  %844 = vmatpush1.msra.mxu0 %v264
  %845 = vmatprep.subr.mxu0 0.0
  %846 = vmatpush1.msra.mxu0 %v265
  %847 = vmatprep.subr.mxu0 0.0
  %848 = vmatpush1.msra.mxu0 %v266
  %849 = vmatprep.subr.mxu0 0.0
  %850 = vmatpush1.msra.mxu0 %v267
  %851 = vmatprep.subr.mxu0 0.0
  %852 = vmatpush1.msra.mxu0 %v268
  %853 = vmatprep.subr.mxu0 0.0
  %854 = vmatpush1.msra.mxu0 %v269
  %855 = vmatprep.subr.mxu0 0.0
  %856 = vmatpush1.msra.mxu0 %v270
  %857 = vmatprep.subr.mxu0 0.0
  %858 = vmatpush1.msra.mxu0 0.0
  %859 = vmatprep.subr.mxu0 0.0
  %860 = vmatpush1.msra.mxu0 0.0
  %861 = vmatprep.subr.mxu0 0.0
  %862 = vmatpush1.msra.mxu0 0.0
  %863 = vmatprep.subr.mxu0 0.0
  %864 = vmatpush1.msra.mxu0 0.0
  %865 = vmatprep.subr.mxu0 0.0
  %866 = vmatpush1.msra.mxu0 0.0
  %867 = vmatprep.subr.mxu0 0.0
  %868 = vmatpush1.msra.mxu0 0.0
  %869 = vmatprep.subr.mxu0 0.0
  %870 = vmatpush1.msra.mxu0 0.0
  %871 = vmatprep.subr.mxu0 0.0
  %872 = vmatpush1.msra.mxu0 0.0
  %873 = vmatprep.subr.mxu0 0.0
  %874 = vmatpush1.msra.mxu0 0.0
  %875 = vmatprep.subr.mxu0 0.0
  %876 = vmatpush1.msra.mxu0 0.0
  %877 = vmatprep.subr.mxu0 0.0
  %878 = vmatpush1.msra.mxu0 0.0
  %879 = vmatprep.subr.mxu0 0.0
  %880 = vmatpush1.msra.mxu0 0.0
  %881 = vmatprep.subr.mxu0 0.0
  %882 = vmatpush1.msra.mxu0 0.0
  %883 = vmatprep.subr.mxu0 0.0
  %884 = vmatpush1.msra.mxu0 0.0
  %885 = vmatprep.subr.mxu0 0.0
  %886 = vmatpush1.msra.mxu0 0.0
  %887 = vmatprep.subr.mxu0 0.0
  %888 = vmatpush1.msra.mxu0 0.0
  %889 = vmatprep.subr.mxu0 0.0
  %890 = vmatpush1.msra.mxu0 0.0
  %891 = vmatprep.subr.mxu0 0.0
  %892 = vmatpush1.msra.mxu0 0.0
  %893 = vmatprep.subr.mxu0 0.0
  %894 = vmatpush1.msra.mxu0 0.0
  %895 = vmatprep.subr.mxu0 0.0
  %896 = vmatpush1.msra.mxu0 0.0
  %897 = vmatprep.subr.mxu0 0.0
  %898 = vmatpush1.msra.mxu0 0.0
  %899 = vmatprep.subr.mxu0 0.0
  %900 = vmatpush1.msra.mxu0 0.0
  %901 = vmatprep.subr.mxu0 0.0
  %902 = vmatpush1.msra.mxu0 0.0
  %903 = vmatprep.subr.mxu0 0.0
  %904 = vmatpush1.msra.mxu0 0.0
  %905 = vmatprep.mubr.f32.mxu0 0.0
  %906 = vmatmul.mubr.f32.gmra.mrb[0].mxu0 %v836
  %v907 = vpop.f32.mrb[0].mxu0
  %v908 = vadd.f32 0.0, %v907
  %v909 = vpop.f32.mrb[0].mxu0
  %910 = vmatprep.mubr.f32.mxu0 0.0
  %911 = vmatmul.mubr.f32.gmra.mrb[0].mxu0 %v839
  %v912 = vpop.f32.mrb[0].mxu0
  %v913 = vadd.f32 0.0, %v912
  %v914 = vpop.f32.mrb[0].mxu0
  %915 = vdwg.mxu0
  %v916 = vadd.f32 %v833, %v908
  %v917 = vadd.f32 %v834, %v913
  %v918 = vtanh.pop %v916
  %v919 = vtanh.pop %v917
  %920 = vst.msk [vmem:[%s457] sm:$0xff] %vm52, %v918
  %921 = vst.msk [vmem:[%s457 + $0x8] sm:$0xff] %vm52, %v919
  %922 = vst.msk [vmem:[%s454] sm:$0xff] %vm363, %v918
  %923 = vst.msk [vmem:[%s454 + $0x8] sm:$0xff] %vm363, %v919
  %s924 = scalar_lea.vmem [#allocation2], 112
  %v925 = vld [vmem:[%s924] sm:$0xff]
  %v926 = vld [vmem:[%s924 + $0x8] sm:$0xff]
  %v928 = vsel %vm246, %v918, 0
  %v931 = vsel %vm246, %v919, 0
  %933 = vmatprep.subr.mxu0 0.0
  %934 = vmatpush1.msra.mxu0 %v263
  %935 = vmatprep.subr.mxu0 0.0
  %936 = vmatpush1.msra.mxu0 %v264
  %937 = vmatprep.subr.mxu0 0.0
  %938 = vmatpush1.msra.mxu0 %v265
  %939 = vmatprep.subr.mxu0 0.0
  %940 = vmatpush1.msra.mxu0 %v266
  %941 = vmatprep.subr.mxu0 0.0
  %942 = vmatpush1.msra.mxu0 %v267
  %943 = vmatprep.subr.mxu0 0.0
  %944 = vmatpush1.msra.mxu0 %v268
  %945 = vmatprep.subr.mxu0 0.0
  %946 = vmatpush1.msra.mxu0 %v269
  %947 = vmatprep.subr.mxu0 0.0
  %948 = vmatpush1.msra.mxu0 %v270
  %949 = vmatprep.subr.mxu0 0.0
  %950 = vmatpush1.msra.mxu0 0.0
  %951 = vmatprep.subr.mxu0 0.0
  %952 = vmatpush1.msra.mxu0 0.0
  %953 = vmatprep.subr.mxu0 0.0
  %954 = vmatpush1.msra.mxu0 0.0
  %955 = vmatprep.subr.mxu0 0.0
  %956 = vmatpush1.msra.mxu0 0.0
  %957 = vmatprep.subr.mxu0 0.0
  %958 = vmatpush1.msra.mxu0 0.0
  %959 = vmatprep.subr.mxu0 0.0
  %960 = vmatpush1.msra.mxu0 0.0
  %961 = vmatprep.subr.mxu0 0.0
  %962 = vmatpush1.msra.mxu0 0.0
  %963 = vmatprep.subr.mxu0 0.0
  %964 = vmatpush1.msra.mxu0 0.0
  %965 = vmatprep.subr.mxu0 0.0
  %966 = vmatpush1.msra.mxu0 0.0
  %967 = vmatprep.subr.mxu0 0.0
  %968 = vmatpush1.msra.mxu0 0.0
  %969 = vmatprep.subr.mxu0 0.0
  %970 = vmatpush1.msra.mxu0 0.0
  %971 = vmatprep.subr.mxu0 0.0
  %972 = vmatpush1.msra.mxu0 0.0
  %973 = vmatprep.subr.mxu0 0.0
  %974 = vmatpush1.msra.mxu0 0.0
  %975 = vmatprep.subr.mxu0 0.0
  %976 = vmatpush1.msra.mxu0 0.0
  %977 = vmatprep.subr.mxu0 0.0
  %978 = vmatpush1.msra.mxu0 0.0
  %979 = vmatprep.subr.mxu0 0.0
  %980 = vmatpush1.msra.mxu0 0.0
  %981 = vmatprep.subr.mxu0 0.0
  %982 = vmatpush1.msra.mxu0 0.0
  %983 = vmatprep.subr.mxu0 0.0
  %984 = vmatpush1.msra.mxu0 0.0
  %985 = vmatprep.subr.mxu0 0.0
  %986 = vmatpush1.msra.mxu0 0.0
  %987 = vmatprep.subr.mxu0 0.0
  %988 = vmatpush1.msra.mxu0 0.0
  %989 = vmatprep.subr.mxu0 0.0
  %990 = vmatpush1.msra.mxu0 0.0
  %991 = vmatprep.subr.mxu0 0.0
  %992 = vmatpush1.msra.mxu0 0.0
  %993 = vmatprep.subr.mxu0 0.0
  %994 = vmatpush1.msra.mxu0 0.0
  %995 = vmatprep.subr.mxu0 0.0
  %996 = vmatpush1.msra.mxu0 0.0
  %997 = vmatprep.mubr.f32.mxu0 0.0
  %998 = vmatmul.mubr.f32.gmra.mrb[0].mxu0 %v928
  %v999 = vpop.f32.mrb[0].mxu0
  %v1000 = vadd.f32 0.0, %v999
  %v1001 = vpop.f32.mrb[0].mxu0
  %1002 = vmatprep.mubr.f32.mxu0 0.0
  %1003 = vmatmul.mubr.f32.gmra.mrb[0].mxu0 %v931
  %v1004 = vpop.f32.mrb[0].mxu0
  %v1005 = vadd.f32 0.0, %v1004
  %v1006 = vpop.f32.mrb[0].mxu0
  %1007 = vdwg.mxu0
  %v1008 = vadd.f32 %v925, %v1000
  %v1009 = vadd.f32 %v926, %v1005
  %v1010 = vtanh.pop %v1008
  %v1011 = vtanh.pop %v1009
  %1012 = vst.msk [vmem:[%s362] sm:$0xff] %vm52, %v1010
  %1013 = vst.msk [vmem:[%s362 + $0x8] sm:$0xff] %vm52, %v1011
  %1014 = vst.msk [vmem:[#allocation3] sm:$0xff] %vm363, %v1010
  %1015 = vst.msk [vmem:[#allocation3 + $0x8] sm:$0xff] %vm363, %v1011
  %v1016 = vld [vmem:[#allocation3] sm:$0xff]
  %v1017 = vld [vmem:[#allocation3 + $0x8] sm:$0xff]
  %v1018 = vld [vmem:[#allocation3 + $0x10] sm:$0xff]
  %v1019 = vld [vmem:[#allocation3 + $0x18] sm:$0xff]
  %v1020 = vld [vmem:[#allocation3 + $0x20] sm:$0xff]
  %v1021 = vld [vmem:[#allocation3 + $0x28] sm:$0xff]
  %v1022 = vld [vmem:[#allocation3 + $0x30] sm:$0xff]
  %v1023 = vld [vmem:[#allocation3 + $0x38] sm:$0xff]
  %v1024 = vld [vmem:[#allocation3 + $0x40] sm:$0xff]
  %v1025 = vld [vmem:[#allocation3 + $0x48] sm:$0xff]
  %v1026 = vld [vmem:[#allocation3 + $0x50] sm:$0xff]
  %v1027 = vld [vmem:[#allocation3 + $0x58] sm:$0xff]
  %v1028 = vld [vmem:[#allocation3 + $0x60] sm:$0xff]
  %v1029 = vld [vmem:[#allocation3 + $0x68] sm:$0xff]
  %v1030 = vld [vmem:[#allocation3 + $0x70] sm:$0xff]
  %v1031 = vld [vmem:[#allocation3 + $0x78] sm:$0xff]
  %v1032 = vld [vmem:[%s4] sm:$0xff]
  %v1033 = vld [vmem:[%s4 + $0x8] sm:$0xff]
  %v1034 = vld [vmem:[%s4 + $0x10] sm:$0xff]
  %v1035 = vld [vmem:[%s4 + $0x18] sm:$0xff]
  %v1036 = vld [vmem:[%s4 + $0x20] sm:$0xff]
  %v1037 = vld [vmem:[%s4 + $0x28] sm:$0xff]
  %v1038 = vld [vmem:[%s4 + $0x30] sm:$0xff]
  %v1039 = vld [vmem:[%s4 + $0x38] sm:$0xff]
  %v1040 = vld [vmem:[%s5] sm:$0xff]
  %v1041 = vld [vmem:[%s5 + $0x8] sm:$0xff]
  %v1042 = vld [vmem:[%s5 + $0x10] sm:$0xff]
  %v1043 = vld [vmem:[%s5 + $0x18] sm:$0xff]
  %1044 = vmatprep.subr.mxu0 0.0
  %1045 = vmatpush1.msra.mxu0 %v1040
  %1046 = vmatprep.subr.mxu0 0.0
  %1047 = vmatpush1.msra.mxu0 %v1041
  %1048 = vmatprep.subr.mxu0 0.0
  %1049 = vmatpush1.msra.mxu0 %v1042
  %1050 = vmatprep.subr.mxu0 0.0
  %1051 = vmatpush1.msra.mxu0 %v1043
  %1052 = vmatprep.subr.mxu0 0.0
  %1053 = vmatpush1.msra.mxu0 0.0
  %1054 = vmatprep.subr.mxu0 0.0
  %1055 = vmatpush1.msra.mxu0 0.0
  %1056 = vmatprep.subr.mxu0 0.0
  %1057 = vmatpush1.msra.mxu0 0.0
  %1058 = vmatprep.subr.mxu0 0.0
  %1059 = vmatpush1.msra.mxu0 0.0
  %1060 = vmatprep.subr.mxu0 0.0
  %1061 = vmatpush1.msra.mxu0 0.0
  %1062 = vmatprep.subr.mxu0 0.0
  %1063 = vmatpush1.msra.mxu0 0.0
  %1064 = vmatprep.subr.mxu0 0.0
  %1065 = vmatpush1.msra.mxu0 0.0
  %1066 = vmatprep.subr.mxu0 0.0
  %1067 = vmatpush1.msra.mxu0 0.0
  %1068 = vmatprep.subr.mxu0 0.0
  %1069 = vmatpush1.msra.mxu0 0.0
  %1070 = vmatprep.subr.mxu0 0.0
  %1071 = vmatpush1.msra.mxu0 0.0
  %1072 = vmatprep.subr.mxu0 0.0
  %1073 = vmatpush1.msra.mxu0 0.0
  %1074 = vmatprep.subr.mxu0 0.0
  %1075 = vmatpush1.msra.mxu0 0.0
  %1076 = vmatprep.subr.mxu0 0.0
  %1077 = vmatpush1.msra.mxu0 0.0
  %1078 = vmatprep.subr.mxu0 0.0
  %1079 = vmatpush1.msra.mxu0 0.0
  %1080 = vmatprep.subr.mxu0 0.0
  %1081 = vmatpush1.msra.mxu0 0.0
  %1082 = vmatprep.subr.mxu0 0.0
  %1083 = vmatpush1.msra.mxu0 0.0
  %1084 = vmatprep.subr.mxu0 0.0
  %1085 = vmatpush1.msra.mxu0 0.0
  %1086 = vmatprep.subr.mxu0 0.0
  %1087 = vmatpush1.msra.mxu0 0.0
  %1088 = vmatprep.subr.mxu0 0.0
  %1089 = vmatpush1.msra.mxu0 0.0
  %1090 = vmatprep.subr.mxu0 0.0
  %1091 = vmatpush1.msra.mxu0 0.0
  %1092 = vmatprep.subr.mxu0 0.0
  %1093 = vmatpush1.msra.mxu0 0.0
  %1094 = vmatprep.subr.mxu0 0.0
  %1095 = vmatpush1.msra.mxu0 0.0
  %1096 = vmatprep.subr.mxu0 0.0
  %1097 = vmatpush1.msra.mxu0 0.0
  %1098 = vmatprep.subr.mxu0 0.0
  %1099 = vmatpush1.msra.mxu0 0.0
  %1100 = vmatprep.subr.mxu0 0.0
  %1101 = vmatpush1.msra.mxu0 0.0
  %1102 = vmatprep.subr.mxu0 0.0
  %1103 = vmatpush1.msra.mxu0 0.0
  %1104 = vmatprep.subr.mxu0 0.0
  %1105 = vmatpush1.msra.mxu0 0.0
  %1106 = vmatprep.subr.mxu0 0.0
  %1107 = vmatpush1.msra.mxu0 0.0
  %1108 = vmatprep.mubr.f32.mxu0 0.0
  %1109 = vmatmul.mubr.f32.gmra.mrb[0].mxu0 %v54
  %v1110 = vpop.f32.mrb[0].mxu0
  %v1111 = vadd.f32 0.0, %v1110
  %v1112 = vpop.f32.mrb[0].mxu0
  %1113 = vmatprep.mubr.f32.mxu0 0.0
  %1114 = vmatmul.mubr.f32.gmra.mrb[0].mxu0 %v57
  %v1115 = vpop.f32.mrb[0].mxu0
  %v1116 = vadd.f32 0.0, %v1115
  %v1117 = vpop.f32.mrb[0].mxu0
  %1118 = vmatprep.mubr.f32.mxu0 0.0
  %1119 = vmatmul.mubr.f32.gmra.mrb[0].mxu0 %v60
  %v1120 = vpop.f32.mrb[0].mxu0
  %v1121 = vadd.f32 0.0, %v1120
  %v1122 = vpop.f32.mrb[0].mxu0
  %1123 = vmatprep.mubr.f32.mxu0 0.0
  %1124 = vmatmul.mubr.f32.gmra.mrb[0].mxu0 %v63
  %v1125 = vpop.f32.mrb[0].mxu0
  %v1126 = vadd.f32 0.0, %v1125
  %v1127 = vpop.f32.mrb[0].mxu0
  %1128 = vmatprep.mubr.f32.mxu0 0.0
  %1129 = vmatmul.mubr.f32.gmra.mrb[0].mxu0 %v66
  %v1130 = vpop.f32.mrb[0].mxu0
  %v1131 = vadd.f32 0.0, %v1130
  %v1132 = vpop.f32.mrb[0].mxu0
  %1133 = vmatprep.mubr.f32.mxu0 0.0
  %1134 = vmatmul.mubr.f32.gmra.mrb[0].mxu0 %v69
  %v1135 = vpop.f32.mrb[0].mxu0
  %v1136 = vadd.f32 0.0, %v1135
  %v1137 = vpop.f32.mrb[0].mxu0
  %1138 = vmatprep.mubr.f32.mxu0 0.0
  %1139 = vmatmul.mubr.f32.gmra.mrb[0].mxu0 %v72
  %v1140 = vpop.f32.mrb[0].mxu0
  %v1141 = vadd.f32 0.0, %v1140
  %v1142 = vpop.f32.mrb[0].mxu0
  %1143 = vmatprep.mubr.f32.mxu0 0.0
  %1144 = vmatmul.mubr.f32.gmra.mrb[0].mxu0 %v75
  %v1145 = vpop.f32.mrb[0].mxu0
  %v1146 = vadd.f32 0.0, %v1145
  %v1147 = vpop.f32.mrb[0].mxu0
  %1148 = vmatprep.mubr.f32.mxu0 0.0
  %1149 = vmatmul.mubr.f32.gmra.mrb[0].mxu0 %v78
  %v1150 = vpop.f32.mrb[0].mxu0
  %v1151 = vadd.f32 0.0, %v1150
  %v1152 = vpop.f32.mrb[0].mxu0
  %1153 = vmatprep.mubr.f32.mxu0 0.0
  %1154 = vmatmul.mubr.f32.gmra.mrb[0].mxu0 %v81
  %v1155 = vpop.f32.mrb[0].mxu0
  %v1156 = vadd.f32 0.0, %v1155
  %v1157 = vpop.f32.mrb[0].mxu0
  %1158 = vmatprep.mubr.f32.mxu0 0.0
  %1159 = vmatmul.mubr.f32.gmra.mrb[0].mxu0 %v84
  %v1160 = vpop.f32.mrb[0].mxu0
  %v1161 = vadd.f32 0.0, %v1160
  %v1162 = vpop.f32.mrb[0].mxu0
  %1163 = vmatprep.mubr.f32.mxu0 0.0
  %1164 = vmatmul.mubr.f32.gmra.mrb[0].mxu0 %v87
  %v1165 = vpop.f32.mrb[0].mxu0
  %v1166 = vadd.f32 0.0, %v1165
  %v1167 = vpop.f32.mrb[0].mxu0
  %1168 = vmatprep.mubr.f32.mxu0 0.0
  %1169 = vmatmul.mubr.f32.gmra.mrb[0].mxu0 %v90
  %v1170 = vpop.f32.mrb[0].mxu0
  %v1171 = vadd.f32 0.0, %v1170
  %v1172 = vpop.f32.mrb[0].mxu0
  %1173 = vmatprep.mubr.f32.mxu0 0.0
  %1174 = vmatmul.mubr.f32.gmra.mrb[0].mxu0 %v93
  %v1175 = vpop.f32.mrb[0].mxu0
  %v1176 = vadd.f32 0.0, %v1175
  %v1177 = vpop.f32.mrb[0].mxu0
  %1178 = vmatprep.mubr.f32.mxu0 0.0
  %1179 = vmatmul.mubr.f32.gmra.mrb[0].mxu0 %v96
  %v1180 = vpop.f32.mrb[0].mxu0
  %v1181 = vadd.f32 0.0, %v1180
  %v1182 = vpop.f32.mrb[0].mxu0
  %1183 = vmatprep.mubr.f32.mxu0 0.0
  %1184 = vmatmul.mubr.f32.gmra.mrb[0].mxu0 %v99
  %v1185 = vpop.f32.mrb[0].mxu0
  %v1186 = vadd.f32 0.0, %v1185
  %v1187 = vpop.f32.mrb[0].mxu0
  %1188 = vdwg.mxu0
  %v1190 = vsel %vm246, %v1016, 0
  %v1193 = vsel %vm246, %v1017, 0
  %v1196 = vsel %vm246, %v1018, 0
  %v1199 = vsel %vm246, %v1019, 0
  %v1202 = vsel %vm246, %v1020, 0
  %v1205 = vsel %vm246, %v1021, 0
  %v1208 = vsel %vm246, %v1022, 0
  %v1211 = vsel %vm246, %v1023, 0
  %v1214 = vsel %vm246, %v1024, 0
  %v1217 = vsel %vm246, %v1025, 0
  %v1220 = vsel %vm246, %v1026, 0
  %v1223 = vsel %vm246, %v1027, 0
  %v1226 = vsel %vm246, %v1028, 0
  %v1229 = vsel %vm246, %v1029, 0
  %v1232 = vsel %vm246, %v1030, 0
  %v1235 = vsel %vm246, %v1031, 0
  %1237 = vmatprep.subr.mxu0 0.0
  %1238 = vmatpush1.msra.mxu0 %v1032
  %1239 = vmatprep.subr.mxu0 0.0
  %1240 = vmatpush1.msra.mxu0 %v1033
  %1241 = vmatprep.subr.mxu0 0.0
  %1242 = vmatpush1.msra.mxu0 %v1034
  %1243 = vmatprep.subr.mxu0 0.0
  %1244 = vmatpush1.msra.mxu0 %v1035
  %1245 = vmatprep.subr.mxu0 0.0
  %1246 = vmatpush1.msra.mxu0 %v1036
  %1247 = vmatprep.subr.mxu0 0.0
  %1248 = vmatpush1.msra.mxu0 %v1037
  %1249 = vmatprep.subr.mxu0 0.0
  %1250 = vmatpush1.msra.mxu0 %v1038
  %1251 = vmatprep.subr.mxu0 0.0
  %1252 = vmatpush1.msra.mxu0 %v1039
  %1253 = vmatprep.subr.mxu0 0.0
  %1254 = vmatpush1.msra.mxu0 0.0
  %1255 = vmatprep.subr.mxu0 0.0
  %1256 = vmatpush1.msra.mxu0 0.0
  %1257 = vmatprep.subr.mxu0 0.0
  %1258 = vmatpush1.msra.mxu0 0.0
  %1259 = vmatprep.subr.mxu0 0.0
  %1260 = vmatpush1.msra.mxu0 0.0
  %1261 = vmatprep.subr.mxu0 0.0
  %1262 = vmatpush1.msra.mxu0 0.0
  %1263 = vmatprep.subr.mxu0 0.0
  %1264 = vmatpush1.msra.mxu0 0.0
  %1265 = vmatprep.subr.mxu0 0.0
  %1266 = vmatpush1.msra.mxu0 0.0
  %1267 = vmatprep.subr.mxu0 0.0
  %1268 = vmatpush1.msra.mxu0 0.0
  %1269 = vmatprep.subr.mxu0 0.0
  %1270 = vmatpush1.msra.mxu0 0.0
  %1271 = vmatprep.subr.mxu0 0.0
  %1272 = vmatpush1.msra.mxu0 0.0
  %1273 = vmatprep.subr.mxu0 0.0
  %1274 = vmatpush1.msra.mxu0 0.0
  %1275 = vmatprep.subr.mxu0 0.0
  %1276 = vmatpush1.msra.mxu0 0.0
  %1277 = vmatprep.subr.mxu0 0.0
  %1278 = vmatpush1.msra.mxu0 0.0
  %1279 = vmatprep.subr.mxu0 0.0
  %1280 = vmatpush1.msra.mxu0 0.0
  %1281 = vmatprep.subr.mxu0 0.0
  %1282 = vmatpush1.msra.mxu0 0.0
  %1283 = vmatprep.subr.mxu0 0.0
  %1284 = vmatpush1.msra.mxu0 0.0
  %1285 = vmatprep.subr.mxu0 0.0
  %1286 = vmatpush1.msra.mxu0 0.0
  %1287 = vmatprep.subr.mxu0 0.0
  %1288 = vmatpush1.msra.mxu0 0.0
  %1289 = vmatprep.subr.mxu0 0.0
  %1290 = vmatpush1.msra.mxu0 0.0
  %1291 = vmatprep.subr.mxu0 0.0
  %1292 = vmatpush1.msra.mxu0 0.0
  %1293 = vmatprep.subr.mxu0 0.0
  %1294 = vmatpush1.msra.mxu0 0.0
  %1295 = vmatprep.subr.mxu0 0.0
  %1296 = vmatpush1.msra.mxu0 0.0
  %1297 = vmatprep.subr.mxu0 0.0
  %1298 = vmatpush1.msra.mxu0 0.0
  %1299 = vmatprep.subr.mxu0 0.0
  %1300 = vmatpush1.msra.mxu0 0.0
  %1301 = vmatprep.mubr.f32.mxu0 0.0
  %1302 = vmatmul.mubr.f32.gmra.mrb[0].mxu0 %v1190
  %v1303 = vpop.f32.mrb[0].mxu0
  %v1304 = vadd.f32 %v1111, %v1303
  %v1305 = vpop.f32.mrb[0].mxu0
  %1306 = vmatprep.mubr.f32.mxu0 0.0
  %1307 = vmatmul.mubr.f32.gmra.mrb[0].mxu0 %v1193
  %v1308 = vpop.f32.mrb[0].mxu0
  %v1309 = vadd.f32 %v1116, %v1308
  %v1310 = vpop.f32.mrb[0].mxu0
  %1311 = vmatprep.mubr.f32.mxu0 0.0
  %1312 = vmatmul.mubr.f32.gmra.mrb[0].mxu0 %v1196
  %v1313 = vpop.f32.mrb[0].mxu0
  %v1314 = vadd.f32 %v1121, %v1313
  %v1315 = vpop.f32.mrb[0].mxu0
  %1316 = vmatprep.mubr.f32.mxu0 0.0
  %1317 = vmatmul.mubr.f32.gmra.mrb[0].mxu0 %v1199
  %v1318 = vpop.f32.mrb[0].mxu0
  %v1319 = vadd.f32 %v1126, %v1318
  %v1320 = vpop.f32.mrb[0].mxu0
  %1321 = vmatprep.mubr.f32.mxu0 0.0
  %1322 = vmatmul.mubr.f32.gmra.mrb[0].mxu0 %v1202
  %v1323 = vpop.f32.mrb[0].mxu0
  %v1324 = vadd.f32 %v1131, %v1323
  %v1325 = vpop.f32.mrb[0].mxu0
  %1326 = vmatprep.mubr.f32.mxu0 0.0
  %1327 = vmatmul.mubr.f32.gmra.mrb[0].mxu0 %v1205
  %v1328 = vpop.f32.mrb[0].mxu0
  %v1329 = vadd.f32 %v1136, %v1328
  %v1330 = vpop.f32.mrb[0].mxu0
  %1331 = vmatprep.mubr.f32.mxu0 0.0
  %1332 = vmatmul.mubr.f32.gmra.mrb[0].mxu0 %v1208
  %v1333 = vpop.f32.mrb[0].mxu0
  %v1334 = vadd.f32 %v1141, %v1333
  %v1335 = vpop.f32.mrb[0].mxu0
  %1336 = vmatprep.mubr.f32.mxu0 0.0
  %1337 = vmatmul.mubr.f32.gmra.mrb[0].mxu0 %v1211
  %v1338 = vpop.f32.mrb[0].mxu0
  %v1339 = vadd.f32 %v1146, %v1338
  %v1340 = vpop.f32.mrb[0].mxu0
  %1341 = vmatprep.mubr.f32.mxu0 0.0
  %1342 = vmatmul.mubr.f32.gmra.mrb[0].mxu0 %v1214
  %v1343 = vpop.f32.mrb[0].mxu0
  %v1344 = vadd.f32 %v1151, %v1343
  %v1345 = vpop.f32.mrb[0].mxu0
  %1346 = vmatprep.mubr.f32.mxu0 0.0
  %1347 = vmatmul.mubr.f32.gmra.mrb[0].mxu0 %v1217
  %v1348 = vpop.f32.mrb[0].mxu0
  %v1349 = vadd.f32 %v1156, %v1348
  %v1350 = vpop.f32.mrb[0].mxu0
  %1351 = vmatprep.mubr.f32.mxu0 0.0
  %1352 = vmatmul.mubr.f32.gmra.mrb[0].mxu0 %v1220
  %v1353 = vpop.f32.mrb[0].mxu0
  %v1354 = vadd.f32 %v1161, %v1353
  %v1355 = vpop.f32.mrb[0].mxu0
  %1356 = vmatprep.mubr.f32.mxu0 0.0
  %1357 = vmatmul.mubr.f32.gmra.mrb[0].mxu0 %v1223
  %v1358 = vpop.f32.mrb[0].mxu0
  %v1359 = vadd.f32 %v1166, %v1358
  %v1360 = vpop.f32.mrb[0].mxu0
  %1361 = vmatprep.mubr.f32.mxu0 0.0
  %1362 = vmatmul.mubr.f32.gmra.mrb[0].mxu0 %v1226
  %v1363 = vpop.f32.mrb[0].mxu0
  %v1364 = vadd.f32 %v1171, %v1363
  %v1365 = vpop.f32.mrb[0].mxu0
  %1366 = vmatprep.mubr.f32.mxu0 0.0
  %1367 = vmatmul.mubr.f32.gmra.mrb[0].mxu0 %v1229
  %v1368 = vpop.f32.mrb[0].mxu0
  %v1369 = vadd.f32 %v1176, %v1368
  %v1370 = vpop.f32.mrb[0].mxu0
  %1371 = vmatprep.mubr.f32.mxu0 0.0
  %1372 = vmatmul.mubr.f32.gmra.mrb[0].mxu0 %v1232
  %v1373 = vpop.f32.mrb[0].mxu0
  %v1374 = vadd.f32 %v1181, %v1373
  %v1375 = vpop.f32.mrb[0].mxu0
  %1376 = vmatprep.mubr.f32.mxu0 0.0
  %1377 = vmatmul.mubr.f32.gmra.mrb[0].mxu0 %v1235
  %v1378 = vpop.f32.mrb[0].mxu0
  %v1379 = vadd.f32 %v1186, %v1378
  %v1380 = vpop.f32.mrb[0].mxu0
  %1381 = vdwg.mxu0
  %1382 = vst.msk [vmem:[#allocation4] sm:$0xff] %vm52, %v1304
  %1383 = vst.msk [vmem:[#allocation4 + $0x8] sm:$0xff] %vm52, %v1309
  %1384 = vst.msk [vmem:[#allocation4 + $0x10] sm:$0xff] %vm52, %v1314
  %1385 = vst.msk [vmem:[#allocation4 + $0x18] sm:$0xff] %vm52, %v1319
  %1386 = vst.msk [vmem:[#allocation4 + $0x20] sm:$0xff] %vm52, %v1324
  %1387 = vst.msk [vmem:[#allocation4 + $0x28] sm:$0xff] %vm52, %v1329
  %1388 = vst.msk [vmem:[#allocation4 + $0x30] sm:$0xff] %vm52, %v1334
  %1389 = vst.msk [vmem:[#allocation4 + $0x38] sm:$0xff] %vm52, %v1339
  %1390 = vst.msk [vmem:[#allocation4 + $0x40] sm:$0xff] %vm52, %v1344
  %1391 = vst.msk [vmem:[#allocation4 + $0x48] sm:$0xff] %vm52, %v1349
  %1392 = vst.msk [vmem:[#allocation4 + $0x50] sm:$0xff] %vm52, %v1354
  %1393 = vst.msk [vmem:[#allocation4 + $0x58] sm:$0xff] %vm52, %v1359
  %1394 = vst.msk [vmem:[#allocation4 + $0x60] sm:$0xff] %vm52, %v1364
  %1395 = vst.msk [vmem:[#allocation4 + $0x68] sm:$0xff] %vm52, %v1369
  %1396 = vst.msk [vmem:[#allocation4 + $0x70] sm:$0xff] %vm52, %v1374
  %1397 = vst.msk [vmem:[#allocation4 + $0x78] sm:$0xff] %vm52, %v1379
  %v1398 = vld [vmem:[#allocation4] sm:$0xff]
  %v1399 = vld [vmem:[#allocation4 + $0x8] sm:$0xff]
  %s1400 = scalar_lea.vmem [#allocation4], 16
  %v1401 = vld [vmem:[%s1400] sm:$0xff]
  %v1402 = vld [vmem:[%s1400 + $0x8] sm:$0xff]
  %v1403 = vmax.f32 %v1398, %v1401
  %v1404 = vmax.f32 %v1399, %v1402
  %s1405 = scalar_lea.vmem [#allocation4], 32
  %v1406 = vld [vmem:[%s1405] sm:$0xff]
  %v1407 = vld [vmem:[%s1405 + $0x8] sm:$0xff]
  %v1408 = vmax.f32 %v1403, %v1406
  %v1409 = vmax.f32 %v1404, %v1407
  %s1410 = scalar_lea.vmem [#allocation4], 48
  %v1411 = vld [vmem:[%s1410] sm:$0xff]
  %v1412 = vld [vmem:[%s1410 + $0x8] sm:$0xff]
  %v1413 = vmax.f32 %v1408, %v1411
  %v1414 = vmax.f32 %v1409, %v1412
  %s1415 = scalar_lea.vmem [#allocation4], 64
  %v1416 = vld [vmem:[%s1415] sm:$0xff]
  %v1417 = vld [vmem:[%s1415 + $0x8] sm:$0xff]
  %v1418 = vmax.f32 %v1413, %v1416
  %v1419 = vmax.f32 %v1414, %v1417
  %s1420 = scalar_lea.vmem [#allocation4], 80
  %v1421 = vld [vmem:[%s1420] sm:$0xff]
  %v1422 = vld [vmem:[%s1420 + $0x8] sm:$0xff]
  %v1423 = vmax.f32 %v1418, %v1421
  %v1424 = vmax.f32 %v1419, %v1422
  %s1425 = scalar_lea.vmem [#allocation4], 96
  %v1426 = vld [vmem:[%s1425] sm:$0xff]
  %v1427 = vld [vmem:[%s1425 + $0x8] sm:$0xff]
  %v1428 = vmax.f32 %v1423, %v1426
  %v1429 = vmax.f32 %v1424, %v1427
  %s1430 = scalar_lea.vmem [#allocation4], 112
  %v1431 = vld [vmem:[%s1430] sm:$0xff]
  %v1432 = vld [vmem:[%s1430 + $0x8] sm:$0xff]
  %v1433 = vmax.f32 %v1428, %v1431
  %v1434 = vmax.f32 %v1429, %v1432
  %v1435 = vld [vmem:[%s6] sm:$0x1]
  %v1437 = vlaneseq
  %v1438 = vshrl.u32 %v1437, 7
  %v1439 = vsub.s32 0, %v1438
  %v1440 = vrot.slane %v1435, %v1439
  %v1442 = vadd.f32 %v1433, %v1440
  %v1443 = vadd.f32 %v1434, %v1440
  %v1444 = vld [vmem:[%s7] sm:$0xff]
  %v1445 = vld [vmem:[%s7 + $0x8] sm:$0xff]
  %v1446 = vld [vmem:[%s7 + $0x10] sm:$0xff]
  %v1447 = vld [vmem:[%s7 + $0x18] sm:$0xff]
  %v1448 = vld [vmem:[%s8] sm:$0x1]
  %v1450 = vlaneseq
  %v1451 = vshrl.u32 %v1450, 7
  %v1452 = vsub.s32 0, %v1451
  %v1453 = vrot.slane %v1448, %v1452
  %v1456 = vsel %vm52, %v1442, 0
  %v1459 = vsel %vm52, %v1443, 0
  %1461 = vmatprep.subr.mxu0 0.0
  %1462 = vmatpush1.msra.mxu0 %v1444
  %1463 = vmatprep.subr.mxu0 0.0
  %1464 = vmatpush1.msra.mxu0 %v1445
  %1465 = vmatprep.subr.mxu0 0.0
  %1466 = vmatpush1.msra.mxu0 %v1446
  %1467 = vmatprep.subr.mxu0 0.0
  %1468 = vmatpush1.msra.mxu0 %v1447
  %1469 = vmatprep.subr.mxu0 0.0
  %1470 = vmatpush1.msra.mxu0 0.0
  %1471 = vmatprep.subr.mxu0 0.0
  %1472 = vmatpush1.msra.mxu0 0.0
  %1473 = vmatprep.subr.mxu0 0.0
  %1474 = vmatpush1.msra.mxu0 0.0
  %1475 = vmatprep.subr.mxu0 0.0
  %1476 = vmatpush1.msra.mxu0 0.0
  %1477 = vmatprep.subr.mxu0 0.0
  %1478 = vmatpush1.msra.mxu0 0.0
  %1479 = vmatprep.subr.mxu0 0.0
  %1480 = vmatpush1.msra.mxu0 0.0
  %1481 = vmatprep.subr.mxu0 0.0
  %1482 = vmatpush1.msra.mxu0 0.0
  %1483 = vmatprep.subr.mxu0 0.0
  %1484 = vmatpush1.msra.mxu0 0.0
  %1485 = vmatprep.subr.mxu0 0.0
  %1486 = vmatpush1.msra.mxu0 0.0
  %1487 = vmatprep.subr.mxu0 0.0
  %1488 = vmatpush1.msra.mxu0 0.0
  %1489 = vmatprep.subr.mxu0 0.0
  %1490 = vmatpush1.msra.mxu0 0.0
  %1491 = vmatprep.subr.mxu0 0.0
  %1492 = vmatpush1.msra.mxu0 0.0
  %1493 = vmatprep.subr.mxu0 0.0
  %1494 = vmatpush1.msra.mxu0 0.0
  %1495 = vmatprep.subr.mxu0 0.0
  %1496 = vmatpush1.msra.mxu0 0.0
  %1497 = vmatprep.subr.mxu0 0.0
  %1498 = vmatpush1.msra.mxu0 0.0
  %1499 = vmatprep.subr.mxu0 0.0
  %1500 = vmatpush1.msra.mxu0 0.0
  %1501 = vmatprep.subr.mxu0 0.0
  %1502 = vmatpush1.msra.mxu0 0.0
  %1503 = vmatprep.subr.mxu0 0.0
  %1504 = vmatpush1.msra.mxu0 0.0
  %1505 = vmatprep.subr.mxu0 0.0
  %1506 = vmatpush1.msra.mxu0 0.0
  %1507 = vmatprep.subr.mxu0 0.0
  %1508 = vmatpush1.msra.mxu0 0.0
  %1509 = vmatprep.subr.mxu0 0.0
  %1510 = vmatpush1.msra.mxu0 0.0
  %1511 = vmatprep.subr.mxu0 0.0
  %1512 = vmatpush1.msra.mxu0 0.0
  %1513 = vmatprep.subr.mxu0 0.0
  %1514 = vmatpush1.msra.mxu0 0.0
  %1515 = vmatprep.subr.mxu0 0.0
  %1516 = vmatpush1.msra.mxu0 0.0
  %1517 = vmatprep.subr.mxu0 0.0
  %1518 = vmatpush1.msra.mxu0 0.0
  %1519 = vmatprep.subr.mxu0 0.0
  %1520 = vmatpush1.msra.mxu0 0.0
  %1521 = vmatprep.subr.mxu0 0.0
  %1522 = vmatpush1.msra.mxu0 0.0
  %1523 = vmatprep.subr.mxu0 0.0
  %1524 = vmatpush1.msra.mxu0 0.0
  %1525 = vmatprep.mubr.f32.mxu0 0.0
  %1526 = vmatmul.mubr.f32.gmra.mrb[0].mxu0 %v1456
  %v1527 = vpop.f32.mrb[0].mxu0
  %v1528 = vadd.f32 %v1453, %v1527
  %v1529 = vpop.f32.mrb[0].mxu0
  %1530 = vmatprep.mubr.f32.mxu0 0.0
  %1531 = vmatmul.mubr.f32.gmra.mrb[0].mxu0 %v1459
  %v1532 = vpop.f32.mrb[0].mxu0
  %v1533 = vadd.f32 %v1453, %v1532
  %v1534 = vpop.f32.mrb[0].mxu0
  %1535 = vdwg.mxu0
  %vm1536 = vcmask 31744
  %1537 = vst.msk [vmem:[%s9] sm:$0xff] %vm1536, %v1528
  %1538 = vst.msk [vmem:[%s9 + $0x8] sm:$0xff] %vm1536, %v1533
  // Predicated region
  $region38: #{tpu_custom_call.1} parent=0 // pred_check
    _
  $region39: #{tpu_custom_call.1} parent=0 // pred_check_branch
    %1540 = sbr.rel (0) target = $region41
  $region40: #{tpu_custom_call.1} parent=0 // pred_region
    _
  $region41: #{tpu_custom_call.1} parent=0 // pred_fallthru
    _
  // Predicated region
  $region42: #{tpu_custom_call.1} parent=0 // pred_check
    _
  $region43: #{tpu_custom_call.1} parent=0 // pred_check_branch
    %1542 = sbr.rel (0) target = $region45
  $region44: #{tpu_custom_call.1} parent=0 // pred_region
    _
  $region45: #{tpu_custom_call.1} parent=0 // pred_fallthru
    _

</llo_original>
